<compile_context>
chip_gen: v6e
topology: v6e:2x2x1
jax: 0.10.0
libtpu: 0.0.40
codegen_flags: <defaults>
</compile_context>

<pallas_src>
import functools

import jax
import jax.numpy as jnp
from jax.experimental import pallas as pl
from jax.experimental.pallas import tpu as pltpu

BN_EPS = 1e-5


def _round_up(x, m):
    return (x + m - 1) // m * m


def se_conv_bn_kernel(xse_ref, w1_ref, b1_ref, x_ref, w2_ref, gamma_ref,
                      beta_ref, o_ref, *, inv_p):
    # ---- conv2d62 (1x1, +bias) on the [1,1] squeeze vector ------------------
    # w1_ref: [C2in, C1], xse_ref: [1, C1]  ->  s: [C2in, 1]
    # (<1 MFLOP: VPU multiply + XLU lane-reduce; recomputed per grid step.)
    s = jnp.sum(w1_ref[...] * xse_ref[...], axis=1, keepdims=True) + b1_ref[...]
    # ---- sigmoid11 (EUP) -----------------------------------------------------
    s = jax.nn.sigmoid(s)                                        # [C2in, 1]

    # ---- operator.mul: per-channel gate over all spatial positions ----------
    y = (x_ref[...] * s).astype(jnp.bfloat16)                    # [C2in, P]

    # ---- conv2d63 (1x1, no bias): this grid step's output-channel slab ------
    # w2_ref: [TILE_CO, C2in] bf16, y: [C2in, P] bf16 -> f32 accumulation.
    z = jnp.dot(w2_ref[...], y, preferred_element_type=jnp.float32)  # [TILE_CO, P]

    # ---- batchnorm2d39 (training mode: biased batch stats over N*H*W) -------
    # One-pass per-channel stats (P is the true, unpadded pixel count).
    mean = jnp.sum(z, axis=1, keepdims=True) * inv_p                 # [TILE_CO, 1]
    mean_sq = jnp.sum(z * z, axis=1, keepdims=True) * inv_p
    var = jnp.maximum(mean_sq - mean * mean, 0.0)
    scale = jax.lax.rsqrt(var + BN_EPS) * gamma_ref[...]
    shift = beta_ref[...] - mean * scale
    o_ref[...] = (z * scale + shift).astype(o_ref.dtype)


def se_conv_bn(x_se, x_feat, w1, b1, w2, gamma, beta, *, tile_co=512):
    """SE tail, channels-major layout.

    x_se:   [1, C1, 1, 1]  (squeeze vector, NCHW)
    x_feat: [1, C2, H, W]  (feature map, NCHW)
    w1:     [C2, C1]       conv2d62.weight[:, :, 0, 0] (natural PyTorch layout)
    b1:     [C2]           conv2d62.bias
    w2:     [C2, C2]       conv2d63.weight[:, :, 0, 0] (natural PyTorch layout)
    gamma, beta: [C2]      BatchNorm2d affine params
    Returns NCHW [1, C2, H, W].
    """
    n, c2, h, w = x_feat.shape
    assert n == 1, "kernel written for batch=1 (as in the reference module)"
    c1 = x_se.shape[1]
    p = h * w

    # Lane-aligned channel padding; output-channel tile for the 1-D grid.
    assert tile_co % 128 == 0
    c2p_in = _round_up(c2, 128)
    t_co = _round_up(c2, 128) if c2 <= tile_co else tile_co
    c2p_out = _round_up(c2, t_co)
    n_tiles = c2p_out // t_co

    f32 = jnp.float32
    xse2 = x_se.reshape(1, c1).astype(f32)
    w1p = jnp.pad(w1.astype(f32), ((0, c2p_in - c2), (0, 0)))
    b1p = jnp.pad(b1.astype(f32), (0, c2p_in - c2)).reshape(c2p_in, 1)
    xfp = jnp.pad(x_feat.reshape(c2, p).astype(f32), ((0, c2p_in - c2), (0, 0)))
    w2p = jnp.pad(w2, ((0, c2p_out - c2), (0, c2p_in - c2))).astype(jnp.bfloat16)
    gp = jnp.pad(gamma.astype(f32), (0, c2p_out - c2)).reshape(c2p_out, 1)
    bp = jnp.pad(beta.astype(f32), (0, c2p_out - c2)).reshape(c2p_out, 1)

    bytes_accessed = (4 * (c1 + c2p_in * (c1 + 1 + p) + 2 * c2p_out)
                      + 2 * c2p_out * c2p_in          # bf16 W2
                      + 4 * c2p_out * p)              # f32 output
    flops = (2 * c2p_out * c2p_in * p                 # main matmul
             + n_tiles * (3 * c2p_in * c1 + 2 * c2p_in * p)   # gate (recomputed)
             + 8 * c2p_out * p)                       # BN
    cost = pl.CostEstimate(flops=flops, transcendentals=n_tiles * c2p_in,
                           bytes_accessed=bytes_accessed)

    kernel = functools.partial(se_conv_bn_kernel, inv_p=1.0 / p)
    out_pad = pl.pallas_call(
        kernel,
        out_shape=jax.ShapeDtypeStruct((c2p_out, p), x_feat.dtype),
        grid_spec=pltpu.PrefetchScalarGridSpec(
            num_scalar_prefetch=0,
            grid=(n_tiles,),
            in_specs=[
                pl.BlockSpec((1, c1), lambda i: (0, 0)),           # x_se
                pl.BlockSpec((c2p_in, c1), lambda i: (0, 0)),      # w1
                pl.BlockSpec((c2p_in, 1), lambda i: (0, 0)),       # b1
                pl.BlockSpec((c2p_in, p), lambda i: (0, 0)),       # x_feat
                pl.BlockSpec((t_co, c2p_in), lambda i: (i, 0)),    # w2 (bf16 slab)
                pl.BlockSpec((t_co, 1), lambda i: (i, 0)),         # gamma
                pl.BlockSpec((t_co, 1), lambda i: (i, 0)),         # beta
            ],
            out_specs=pl.BlockSpec((t_co, p), lambda i: (i, 0)),
        ),
        compiler_params=pltpu.CompilerParams(
            dimension_semantics=("parallel",),
            vmem_limit_bytes=64 * 1024 * 1024,
        ),
        cost_estimate=cost,
    )(xse2, w1p, b1p, xfp, w2p, gp, bp)

    return out_pad[:c2].reshape(n, c2, h, w)


def reference(x_se, x_feat, w1, b1, w2, gamma, beta):
    """Pure-JAX reference (NCHW); second matmul in bf16 like the kernel."""
    n, c2, h, w = x_feat.shape
    c1 = x_se.shape[1]
    s = jax.nn.sigmoid(x_se.reshape(1, c1) @ w1.T + b1.reshape(1, c2))   # [1, C2]
    y = x_feat * s.reshape(1, c2, 1, 1)
    yf = y.reshape(c2, h * w).astype(jnp.bfloat16)
    zf = jnp.dot(w2.astype(jnp.bfloat16), yf, preferred_element_type=jnp.float32)
    z = zf.reshape(n, c2, h, w)
    mean = jnp.mean(z, axis=(0, 2, 3), keepdims=True)
    var = jnp.mean((z - mean) ** 2, axis=(0, 2, 3), keepdims=True)
    return (z - mean) * jax.lax.rsqrt(var + BN_EPS) * gamma.reshape(1, c2, 1, 1) \
        + beta.reshape(1, c2, 1, 1)


if __name__ == "__main__":
    def make_inputs(key, c1, c2, h, w):
        k = jax.random.split(key, 7)
        x_se = jax.random.normal(k[0], (1, c1, 1, 1), jnp.float32)
        x_feat = jax.random.normal(k[1], (1, c2, h, w), jnp.float32)
        w1 = jax.random.normal(k[2], (c2, c1), jnp.float32) * 0.05
        b1 = jax.random.normal(k[3], (c2,), jnp.float32) * 0.05
        w2 = jax.random.normal(k[4], (c2, c2), jnp.float32) * 0.05
        gamma = 1.0 + 0.1 * jax.random.normal(k[5], (c2,), jnp.float32)
        beta = 0.1 * jax.random.normal(k[6], (c2,), jnp.float32)
        return x_se, x_feat, w1, b1, w2, gamma, beta

    key = jax.random.PRNGKey(0)
    k1, k2 = jax.random.split(key)

    # Test 1: non-128-multiple channels (176 -> pad 256) and ragged P=49,
    # mirroring the real 1392-channel / 14x14 structure at small scale.
    args1 = make_inputs(k1, 48, 176, 7, 7)
    out1 = jax.block_until_ready(se_conv_bn(*args1))
    ref1 = jax.block_until_ready(reference(*args1))
    assert out1.shape == (1, 176, 7, 7)
    assert jnp.allclose(out1, ref1, atol=2e-3, rtol=2e-3), \
        float(jnp.max(jnp.abs(out1 - ref1)))

    # Test 2: exercises the multi-tile output-channel grid (2 tiles of 128,
    # last tile partially padded) with a small tile size.
    args2 = make_inputs(k2, 32, 200, 8, 8)
    out2 = jax.block_until_ready(se_conv_bn(*args2, tile_co=128))
    ref2 = jax.block_until_ready(reference(*args2))
    assert out2.shape == (1, 200, 8, 8)
    assert jnp.allclose(out2, ref2, atol=2e-3, rtol=2e-3), \
        float(jnp.max(jnp.abs(out2 - ref2)))

    print("KERNEL_OK")
</pallas_src>

<mosaic_0001>
module attributes {stable_mosaic.version = 11 : i64} {
  func.func @se_conv_bn_kernel(%arg0: i32, %arg1: memref<1x48xf32, #tpu.memory_space<vmem>>, %arg2: memref<256x48xf32, #tpu.memory_space<vmem>>, %arg3: memref<256x1xf32, #tpu.memory_space<vmem>>, %arg4: memref<256x49xf32, #tpu.memory_space<vmem>>, %arg5: memref<256x256xbf16, #tpu.memory_space<vmem>>, %arg6: memref<256x1xf32, #tpu.memory_space<vmem>>, %arg7: memref<256x1xf32, #tpu.memory_space<vmem>>, %arg8: memref<256x49xf32, #tpu.memory_space<vmem>>) attributes {dimension_semantics = [#tpu.dimension_semantics<parallel>], iteration_bounds = array<i64: 1>, scalar_prefetch = 0 : i64, scratch_operands = 0 : i64, tpu.core_type = #tpu.core_type<tc>, window_params = [{pipeline_mode = #tpu.pipeline_mode<synchronous>, transform_indices = @transform_0, window_bounds = array<i64: 1, 48>}, {pipeline_mode = #tpu.pipeline_mode<synchronous>, transform_indices = @transform_1, window_bounds = array<i64: 256, 48>}, {pipeline_mode = #tpu.pipeline_mode<synchronous>, transform_indices = @transform_2, window_bounds = array<i64: 256, 1>}, {pipeline_mode = #tpu.pipeline_mode<synchronous>, transform_indices = @transform_3, window_bounds = array<i64: 256, 49>}, {transform_indices = @transform_4, window_bounds = array<i64: 256, 256>}, {transform_indices = @transform_5, window_bounds = array<i64: 256, 1>}, {transform_indices = @transform_6, window_bounds = array<i64: 256, 1>}, {transform_indices = @transform_7, window_bounds = array<i64: 256, 49>}]} {
    %c0 = arith.constant 0 : index
    %c0_0 = arith.constant 0 : index
    %0 = vector.load %arg2[%c0, %c0_0] : memref<256x48xf32, #tpu.memory_space<vmem>>, vector<256x48xf32>
    %c0_1 = arith.constant 0 : index
    %c0_2 = arith.constant 0 : index
    %1 = vector.load %arg1[%c0_1, %c0_2] : memref<1x48xf32, #tpu.memory_space<vmem>>, vector<1x48xf32>
    %2 = vector.broadcast %1 : vector<1x48xf32> to vector<256x48xf32>
    %3 = arith.mulf %0, %2 : vector<256x48xf32>
    %cst = arith.constant dense<0.000000e+00> : vector<256xf32>
    %4 = vector.multi_reduction <add>, %3, %cst [1] : vector<256x48xf32> to vector<256xf32>
    %5 = vector.shape_cast %4 : vector<256xf32> to vector<256x1xf32>
    %c0_3 = arith.constant 0 : index
    %c0_4 = arith.constant 0 : index
    %6 = vector.load %arg3[%c0_3, %c0_4] : memref<256x1xf32, #tpu.memory_space<vmem>>, vector<256x1xf32>
    %7 = arith.addf %5, %6 : vector<256x1xf32>
    %8 = arith.negf %7 : vector<256x1xf32>
    %9 = math.exp %8 : vector<256x1xf32>
    %cst_5 = arith.constant 1.000000e+00 : f32
    %10 = vector.broadcast %cst_5 : f32 to vector<256x1xf32>
    %11 = arith.addf %10, %9 : vector<256x1xf32>
    %12 = arith.divf %10, %11 : vector<256x1xf32>
    %c0_6 = arith.constant 0 : index
    %c0_7 = arith.constant 0 : index
    %13 = vector.load %arg4[%c0_6, %c0_7] : memref<256x49xf32, #tpu.memory_space<vmem>>, vector<256x49xf32>
    %14 = vector.broadcast %12 : vector<256x1xf32> to vector<256x49xf32>
    %15 = arith.mulf %13, %14 : vector<256x49xf32>
    %16 = arith.truncf %15 : vector<256x49xf32> to vector<256x49xbf16>
    %c0_8 = arith.constant 0 : index
    %c0_9 = arith.constant 0 : index
    %17 = vector.load %arg5[%c0_8, %c0_9] : memref<256x256xbf16, #tpu.memory_space<vmem>>, vector<256x256xbf16>
    %cst_10 = arith.constant dense<0.000000e+00> : vector<256x49xf32>
    %18 = tpu.matmul %17, %16, %cst_10 {dimension_numbers = #tpu.dot_dimension_numbers<[1], [0], [0], [1], [0, 0, 1, 1], [], []>} : vector<256x256xbf16>, vector<256x49xbf16>, vector<256x49xf32> -> vector<256x49xf32>
    %cst_11 = arith.constant dense<0.000000e+00> : vector<256xf32>
    %19 = vector.multi_reduction <add>, %18, %cst_11 [1] : vector<256x49xf32> to vector<256xf32>
    %20 = vector.shape_cast %19 : vector<256xf32> to vector<256x1xf32>
    %cst_12 = arith.constant 0.0204081628 : f32
    %21 = vector.broadcast %cst_12 : f32 to vector<256x1xf32>
    %22 = arith.mulf %20, %21 : vector<256x1xf32>
    %23 = arith.mulf %18, %18 : vector<256x49xf32>
    %cst_13 = arith.constant dense<0.000000e+00> : vector<256xf32>
    %24 = vector.multi_reduction <add>, %23, %cst_13 [1] : vector<256x49xf32> to vector<256xf32>
    %25 = vector.shape_cast %24 : vector<256xf32> to vector<256x1xf32>
    %cst_14 = arith.constant 0.0204081628 : f32
    %26 = vector.broadcast %cst_14 : f32 to vector<256x1xf32>
    %27 = arith.mulf %25, %26 : vector<256x1xf32>
    %28 = arith.mulf %22, %22 : vector<256x1xf32>
    %29 = arith.subf %27, %28 : vector<256x1xf32>
    %cst_15 = arith.constant 0.000000e+00 : f32
    %30 = vector.broadcast %cst_15 : f32 to vector<256x1xf32>
    %31 = arith.maximumf %29, %30 : vector<256x1xf32>
    %cst_16 = arith.constant 9.99999974E-6 : f32
    %32 = vector.broadcast %cst_16 : f32 to vector<256x1xf32>
    %33 = arith.addf %31, %32 : vector<256x1xf32>
    %34 = math.rsqrt %33 : vector<256x1xf32>
    %c0_17 = arith.constant 0 : index
    %c0_18 = arith.constant 0 : index
    %35 = vector.load %arg6[%c0_17, %c0_18] : memref<256x1xf32, #tpu.memory_space<vmem>>, vector<256x1xf32>
    %36 = arith.mulf %34, %35 : vector<256x1xf32>
    %c0_19 = arith.constant 0 : index
    %c0_20 = arith.constant 0 : index
    %37 = vector.load %arg7[%c0_19, %c0_20] : memref<256x1xf32, #tpu.memory_space<vmem>>, vector<256x1xf32>
    %38 = arith.mulf %22, %36 : vector<256x1xf32>
    %39 = arith.subf %37, %38 : vector<256x1xf32>
    %40 = vector.broadcast %36 : vector<256x1xf32> to vector<256x49xf32>
    %41 = arith.mulf %18, %40 : vector<256x49xf32>
    %42 = vector.broadcast %39 : vector<256x1xf32> to vector<256x49xf32>
    %43 = arith.addf %41, %42 : vector<256x49xf32>
    %c0_21 = arith.constant 0 : index
    %c0_22 = arith.constant 0 : index
    %44 = vector.load %arg8[%c0_21, %c0_22] : memref<256x49xf32, #tpu.memory_space<vmem>>, vector<256x49xf32>
    tpu.vector_store %arg8[%c0_21, %c0_22], %43 {strides = array<i32>} : memref<256x49xf32, #tpu.memory_space<vmem>>, vector<256x49xf32>,
    return
  }
  func.func @transform_0(%arg0: i32) -> (i32, i32) {
    %c0_i32 = arith.constant 0 : i32
    %c0_i32_0 = arith.constant 0 : i32
    %c0_i32_1 = arith.constant 0 : i32
    return %c0_i32, %c0_i32_0 : i32, i32
  }
  func.func @transform_1(%arg0: i32) -> (i32, i32) {
    %c0_i32 = arith.constant 0 : i32
    %c0_i32_0 = arith.constant 0 : i32
    %c0_i32_1 = arith.constant 0 : i32
    return %c0_i32, %c0_i32_0 : i32, i32
  }
  func.func @transform_2(%arg0: i32) -> (i32, i32) {
    %c0_i32 = arith.constant 0 : i32
    %c0_i32_0 = arith.constant 0 : i32
    %c0_i32_1 = arith.constant 0 : i32
    return %c0_i32, %c0_i32_0 : i32, i32
  }
  func.func @transform_3(%arg0: i32) -> (i32, i32) {
    %c0_i32 = arith.constant 0 : i32
    %c0_i32_0 = arith.constant 0 : i32
    %c0_i32_1 = arith.constant 0 : i32
    return %c0_i32, %c0_i32_0 : i32, i32
  }
  func.func @transform_4(%arg0: i32) -> (i32, i32) {
    %c0_i32 = arith.constant 0 : i32
    %c0_i32_0 = arith.constant 0 : i32
    return %arg0, %c0_i32 : i32, i32
  }
  func.func @transform_5(%arg0: i32) -> (i32, i32) {
    %c0_i32 = arith.constant 0 : i32
    %c0_i32_0 = arith.constant 0 : i32
    return %arg0, %c0_i32 : i32, i32
  }
  func.func @transform_6(%arg0: i32) -> (i32, i32) {
    %c0_i32 = arith.constant 0 : i32
    %c0_i32_0 = arith.constant 0 : i32
    return %arg0, %c0_i32 : i32, i32
  }
  func.func @transform_7(%arg0: i32) -> (i32, i32) {
    %c0_i32 = arith.constant 0 : i32
    %c0_i32_0 = arith.constant 0 : i32
    return %arg0, %c0_i32 : i32, i32
  }
}

</mosaic_0001>

<llo_original>
// kernel: tpu_custom_call.1
$region0: #{tpu_custom_call.1}
  #allocation0 [shape = 'u32[]', space=smem, size = 0x4, offset = 0x4, fixed_abs, tag = 'smem constant byte address 0x4 - core index']
  #allocation1 [shape = 'u32[144,128]{1,0:T(1,128)}', space=vmem, size = 0x12000, scoped, tag = 'internal scratch']
  %s0 = inlined_call_operand.vmem [shape: f32[1,48], index: 0, kind: input, shape index: {}]
  %s1 = inlined_call_operand.vmem [shape: f32[256,48], index: 1, kind: input, shape index: {}]
  %s2 = inlined_call_operand.vmem [shape: f32[256,1], index: 2, kind: input, shape index: {}]
  %s3 = inlined_call_operand.vmem [shape: f32[256,49], index: 3, kind: input, shape index: {}]
  %s4 = inlined_call_operand.vmem [shape: bf16[256,256], index: 4, kind: input, shape index: {}]
  %s5 = inlined_call_operand.vmem [shape: f32[256,1], index: 5, kind: input, shape index: {}]
  %s6 = inlined_call_operand.vmem [shape: f32[256,1], index: 6, kind: input, shape index: {}]
  %s7 = inlined_call_operand.vmem [shape: f32[256,49], index: 7, kind: output, shape index: {}]
  %s8 = sld [smem:[#allocation0]]
  $region38: #{tpu_custom_call.1} parent=0
    _
  %s10 = ssub.s32 1, %s8
  %s11 = scalar_select 0, %s10, %s8
  // Predicated region
  $region2: #{tpu_custom_call.1} parent=0 // pred_check
    _
  $region3: #{tpu_custom_call.1} parent=0 // pred_check_branch
    %13 = sbr.rel (0) target = $region5
  $region4: #{tpu_custom_call.1} parent=0 // pred_region
    _
  $region5: #{tpu_custom_call.1} parent=0 // pred_fallthru
    _
  // Predicated region
  $region6: #{tpu_custom_call.1} parent=0 // pred_check
    _
  $region7: #{tpu_custom_call.1} parent=0 // pred_check_branch
    %15 = sbr.rel (0) target = $region9
  $region8: #{tpu_custom_call.1} parent=0 // pred_region
    _
  $region9: #{tpu_custom_call.1} parent=0 // pred_fallthru
    _
  // Predicated region
  $region10: #{tpu_custom_call.1} parent=0 // pred_check
    _
  $region11: #{tpu_custom_call.1} parent=0 // pred_check_branch
    %17 = sbr.rel (0) target = $region13
  $region12: #{tpu_custom_call.1} parent=0 // pred_region
    _
  $region13: #{tpu_custom_call.1} parent=0 // pred_fallthru
    _
  // Predicated region
  $region14: #{tpu_custom_call.1} parent=0 // pred_check
    _
  $region15: #{tpu_custom_call.1} parent=0 // pred_check_branch
    %19 = sbr.rel (0) target = $region17
  $region16: #{tpu_custom_call.1} parent=0 // pred_region
    _
  $region17: #{tpu_custom_call.1} parent=0 // pred_fallthru
    _
  // Predicated region
  $region18: #{tpu_custom_call.1} parent=0 // pred_check
    _
  $region19: #{tpu_custom_call.1} parent=0 // pred_check_branch
    %21 = sbr.rel (0) target = $region21
  $region20: #{tpu_custom_call.1} parent=0 // pred_region
    _
  $region21: #{tpu_custom_call.1} parent=0 // pred_fallthru
    _
  // Predicated region
  $region22: #{tpu_custom_call.1} parent=0 // pred_check
    _
  $region23: #{tpu_custom_call.1} parent=0 // pred_check_branch
    %23 = sbr.rel (0) target = $region25
  $region24: #{tpu_custom_call.1} parent=0 // pred_region
    _
  $region25: #{tpu_custom_call.1} parent=0 // pred_fallthru
    _
  // Predicated region
  $region26: #{tpu_custom_call.1} parent=0 // pred_check
    _
  $region27: #{tpu_custom_call.1} parent=0 // pred_check_branch
    %25 = sbr.rel (0) target = $region29
  $region28: #{tpu_custom_call.1} parent=0 // pred_region
    _
  $region29: #{tpu_custom_call.1} parent=0 // pred_fallthru
    _
  %v27 = vld [vmem:[%s1] sm:$0xff]
  %v28 = vld [vmem:[%s1 + $0x8] sm:$0xff]
  %v29 = vld [vmem:[%s1 + $0x10] sm:$0xff]
  %v30 = vld [vmem:[%s1 + $0x18] sm:$0xff]
  %v31 = vld [vmem:[%s1 + $0x20] sm:$0xff]
  %v32 = vld [vmem:[%s1 + $0x28] sm:$0xff]
  %v33 = vld [vmem:[%s1 + $0x30] sm:$0xff]
  %v34 = vld [vmem:[%s1 + $0x38] sm:$0xff]
  %v35 = vld [vmem:[%s1 + $0x40] sm:$0xff]
  %v36 = vld [vmem:[%s1 + $0x48] sm:$0xff]
  %v37 = vld [vmem:[%s1 + $0x50] sm:$0xff]
  %v38 = vld [vmem:[%s1 + $0x58] sm:$0xff]
  %v39 = vld [vmem:[%s1 + $0x60] sm:$0xff]
  %v40 = vld [vmem:[%s1 + $0x68] sm:$0xff]
  %v41 = vld [vmem:[%s1 + $0x70] sm:$0xff]
  %v42 = vld [vmem:[%s1 + $0x78] sm:$0xff]
  %v43 = vld [vmem:[%s1 + $0x80] sm:$0xff]
  %v44 = vld [vmem:[%s1 + $0x88] sm:$0xff]
  %v45 = vld [vmem:[%s1 + $0x90] sm:$0xff]
  %v46 = vld [vmem:[%s1 + $0x98] sm:$0xff]
  %v47 = vld [vmem:[%s1 + $0xa0] sm:$0xff]
  %v48 = vld [vmem:[%s1 + $0xa8] sm:$0xff]
  %v49 = vld [vmem:[%s1 + $0xb0] sm:$0xff]
  %v50 = vld [vmem:[%s1 + $0xb8] sm:$0xff]
  %v51 = vld [vmem:[%s1 + $0xc0] sm:$0xff]
  %v52 = vld [vmem:[%s1 + $0xc8] sm:$0xff]
  %v53 = vld [vmem:[%s1 + $0xd0] sm:$0xff]
  %v54 = vld [vmem:[%s1 + $0xd8] sm:$0xff]
  %v55 = vld [vmem:[%s1 + $0xe0] sm:$0xff]
  %v56 = vld [vmem:[%s1 + $0xe8] sm:$0xff]
  %v57 = vld [vmem:[%s1 + $0xf0] sm:$0xff]
  %v58 = vld [vmem:[%s1 + $0xf8] sm:$0xff]
  %v59 = vld [vmem:[%s0] sm:$0x1]
  %v61 = vlaneseq
  %v62 = vshrl.u32 %v61, 7
  %v63 = vsub.s32 0, %v62
  %v64 = vrot.slane %v59, %v63
  %v66 = vmul.f32 %v27, %v64
  %v67 = vmul.f32 %v28, %v64
  %v68 = vmul.f32 %v29, %v64
  %v69 = vmul.f32 %v30, %v64
  %v70 = vmul.f32 %v31, %v64
  %v71 = vmul.f32 %v32, %v64
  %v72 = vmul.f32 %v33, %v64
  %v73 = vmul.f32 %v34, %v64
  %v74 = vmul.f32 %v35, %v64
  %v75 = vmul.f32 %v36, %v64
  %v76 = vmul.f32 %v37, %v64
  %v77 = vmul.f32 %v38, %v64
  %v78 = vmul.f32 %v39, %v64
  %v79 = vmul.f32 %v40, %v64
  %v80 = vmul.f32 %v41, %v64
  %v81 = vmul.f32 %v42, %v64
  %v82 = vmul.f32 %v43, %v64
  %v83 = vmul.f32 %v44, %v64
  %v84 = vmul.f32 %v45, %v64
  %v85 = vmul.f32 %v46, %v64
  %v86 = vmul.f32 %v47, %v64
  %v87 = vmul.f32 %v48, %v64
  %v88 = vmul.f32 %v49, %v64
  %v89 = vmul.f32 %v50, %v64
  %v90 = vmul.f32 %v51, %v64
  %v91 = vmul.f32 %v52, %v64
  %v92 = vmul.f32 %v53, %v64
  %v93 = vmul.f32 %v54, %v64
  %v94 = vmul.f32 %v55, %v64
  %v95 = vmul.f32 %v56, %v64
  %v96 = vmul.f32 %v57, %v64
  %v97 = vmul.f32 %v58, %v64
  %vm98 = vcmask 392192
  %v99 = vsel %vm98, %v66, 0.0
  %100 = vadd.xlane.f32.xlu0 %v99
  %v101 = vpop.xlane.xlu0 %100
  %v102 = vsel %vm98, %v67, 0.0
  %103 = vadd.xlane.f32.xlu0 %v102
  %v104 = vpop.xlane.xlu0 %103
  %v105 = vsel %vm98, %v68, 0.0
  %106 = vadd.xlane.f32.xlu0 %v105
  %v107 = vpop.xlane.xlu0 %106
  %v108 = vsel %vm98, %v69, 0.0
  %109 = vadd.xlane.f32.xlu0 %v108
  %v110 = vpop.xlane.xlu0 %109
  %v111 = vsel %vm98, %v70, 0.0
  %112 = vadd.xlane.f32.xlu0 %v111
  %v113 = vpop.xlane.xlu0 %112
  %v114 = vsel %vm98, %v71, 0.0
  %115 = vadd.xlane.f32.xlu0 %v114
  %v116 = vpop.xlane.xlu0 %115
  %v117 = vsel %vm98, %v72, 0.0
  %118 = vadd.xlane.f32.xlu0 %v117
  %v119 = vpop.xlane.xlu0 %118
  %v120 = vsel %vm98, %v73, 0.0
  %121 = vadd.xlane.f32.xlu0 %v120
  %v122 = vpop.xlane.xlu0 %121
  %v123 = vsel %vm98, %v74, 0.0
  %124 = vadd.xlane.f32.xlu0 %v123
  %v125 = vpop.xlane.xlu0 %124
  %v126 = vsel %vm98, %v75, 0.0
  %127 = vadd.xlane.f32.xlu0 %v126
  %v128 = vpop.xlane.xlu0 %127
  %v129 = vsel %vm98, %v76, 0.0
  %130 = vadd.xlane.f32.xlu0 %v129
  %v131 = vpop.xlane.xlu0 %130
  %v132 = vsel %vm98, %v77, 0.0
  %133 = vadd.xlane.f32.xlu0 %v132
  %v134 = vpop.xlane.xlu0 %133
  %v135 = vsel %vm98, %v78, 0.0
  %136 = vadd.xlane.f32.xlu0 %v135
  %v137 = vpop.xlane.xlu0 %136
  %v138 = vsel %vm98, %v79, 0.0
  %139 = vadd.xlane.f32.xlu0 %v138
  %v140 = vpop.xlane.xlu0 %139
  %v141 = vsel %vm98, %v80, 0.0
  %142 = vadd.xlane.f32.xlu0 %v141
  %v143 = vpop.xlane.xlu0 %142
  %v144 = vsel %vm98, %v81, 0.0
  %145 = vadd.xlane.f32.xlu0 %v144
  %v146 = vpop.xlane.xlu0 %145
  %v147 = vsel %vm98, %v82, 0.0
  %148 = vadd.xlane.f32.xlu0 %v147
  %v149 = vpop.xlane.xlu0 %148
  %v150 = vsel %vm98, %v83, 0.0
  %151 = vadd.xlane.f32.xlu0 %v150
  %v152 = vpop.xlane.xlu0 %151
  %v153 = vsel %vm98, %v84, 0.0
  %154 = vadd.xlane.f32.xlu0 %v153
  %v155 = vpop.xlane.xlu0 %154
  %v156 = vsel %vm98, %v85, 0.0
  %157 = vadd.xlane.f32.xlu0 %v156
  %v158 = vpop.xlane.xlu0 %157
  %v159 = vsel %vm98, %v86, 0.0
  %160 = vadd.xlane.f32.xlu0 %v159
  %v161 = vpop.xlane.xlu0 %160
  %v162 = vsel %vm98, %v87, 0.0
  %163 = vadd.xlane.f32.xlu0 %v162
  %v164 = vpop.xlane.xlu0 %163
  %v165 = vsel %vm98, %v88, 0.0
  %166 = vadd.xlane.f32.xlu0 %v165
  %v167 = vpop.xlane.xlu0 %166
  %v168 = vsel %vm98, %v89, 0.0
  %169 = vadd.xlane.f32.xlu0 %v168
  %v170 = vpop.xlane.xlu0 %169
  %v171 = vsel %vm98, %v90, 0.0
  %172 = vadd.xlane.f32.xlu0 %v171
  %v173 = vpop.xlane.xlu0 %172
  %v174 = vsel %vm98, %v91, 0.0
  %175 = vadd.xlane.f32.xlu0 %v174
  %v176 = vpop.xlane.xlu0 %175
  %v177 = vsel %vm98, %v92, 0.0
  %178 = vadd.xlane.f32.xlu0 %v177
  %v179 = vpop.xlane.xlu0 %178
  %v180 = vsel %vm98, %v93, 0.0
  %181 = vadd.xlane.f32.xlu0 %v180
  %v182 = vpop.xlane.xlu0 %181
  %v183 = vsel %vm98, %v94, 0.0
  %184 = vadd.xlane.f32.xlu0 %v183
  %v185 = vpop.xlane.xlu0 %184
  %v186 = vsel %vm98, %v95, 0.0
  %187 = vadd.xlane.f32.xlu0 %v186
  %v188 = vpop.xlane.xlu0 %187
  %v189 = vsel %vm98, %v96, 0.0
  %190 = vadd.xlane.f32.xlu0 %v189
  %v191 = vpop.xlane.xlu0 %190
  %v192 = vsel %vm98, %v97, 0.0
  %193 = vadd.xlane.f32.xlu0 %v192
  %v194 = vpop.xlane.xlu0 %193
  %v195 = vld [vmem:[%s2] sm:$0xff]
  %v196 = vld [vmem:[%s2 + $0x8] sm:$0xff]
  %v197 = vld [vmem:[%s2 + $0x10] sm:$0xff]
  %v198 = vld [vmem:[%s2 + $0x18] sm:$0xff]
  %v199 = vld [vmem:[%s2 + $0x20] sm:$0xff]
  %v200 = vld [vmem:[%s2 + $0x28] sm:$0xff]
  %v201 = vld [vmem:[%s2 + $0x30] sm:$0xff]
  %v202 = vld [vmem:[%s2 + $0x38] sm:$0xff]
  %v203 = vld [vmem:[%s2 + $0x40] sm:$0xff]
  %v204 = vld [vmem:[%s2 + $0x48] sm:$0xff]
  %v205 = vld [vmem:[%s2 + $0x50] sm:$0xff]
  %v206 = vld [vmem:[%s2 + $0x58] sm:$0xff]
  %v207 = vld [vmem:[%s2 + $0x60] sm:$0xff]
  %v208 = vld [vmem:[%s2 + $0x68] sm:$0xff]
  %v209 = vld [vmem:[%s2 + $0x70] sm:$0xff]
  %v210 = vld [vmem:[%s2 + $0x78] sm:$0xff]
  %v211 = vld [vmem:[%s2 + $0x80] sm:$0xff]
  %v212 = vld [vmem:[%s2 + $0x88] sm:$0xff]
  %v213 = vld [vmem:[%s2 + $0x90] sm:$0xff]
  %v214 = vld [vmem:[%s2 + $0x98] sm:$0xff]
  %v215 = vld [vmem:[%s2 + $0xa0] sm:$0xff]
  %v216 = vld [vmem:[%s2 + $0xa8] sm:$0xff]
  %v217 = vld [vmem:[%s2 + $0xb0] sm:$0xff]
  %v218 = vld [vmem:[%s2 + $0xb8] sm:$0xff]
  %v219 = vld [vmem:[%s2 + $0xc0] sm:$0xff]
  %v220 = vld [vmem:[%s2 + $0xc8] sm:$0xff]
  %v221 = vld [vmem:[%s2 + $0xd0] sm:$0xff]
  %v222 = vld [vmem:[%s2 + $0xd8] sm:$0xff]
  %v223 = vld [vmem:[%s2 + $0xe0] sm:$0xff]
  %v224 = vld [vmem:[%s2 + $0xe8] sm:$0xff]
  %v225 = vld [vmem:[%s2 + $0xf0] sm:$0xff]
  %v226 = vld [vmem:[%s2 + $0xf8] sm:$0xff]
  %v227 = vadd.f32 %v101, %v195
  %v228 = vadd.f32 %v104, %v196
  %v229 = vadd.f32 %v107, %v197
  %v230 = vadd.f32 %v110, %v198
  %v231 = vadd.f32 %v113, %v199
  %v232 = vadd.f32 %v116, %v200
  %v233 = vadd.f32 %v119, %v201
  %v234 = vadd.f32 %v122, %v202
  %v235 = vadd.f32 %v125, %v203
  %v236 = vadd.f32 %v128, %v204
  %v237 = vadd.f32 %v131, %v205
  %v238 = vadd.f32 %v134, %v206
  %v239 = vadd.f32 %v137, %v207
  %v240 = vadd.f32 %v140, %v208
  %v241 = vadd.f32 %v143, %v209
  %v242 = vadd.f32 %v146, %v210
  %v243 = vadd.f32 %v149, %v211
  %v244 = vadd.f32 %v152, %v212
  %v245 = vadd.f32 %v155, %v213
  %v246 = vadd.f32 %v158, %v214
  %v247 = vadd.f32 %v161, %v215
  %v248 = vadd.f32 %v164, %v216
  %v249 = vadd.f32 %v167, %v217
  %v250 = vadd.f32 %v170, %v218
  %v251 = vadd.f32 %v173, %v219
  %v252 = vadd.f32 %v176, %v220
  %v253 = vadd.f32 %v179, %v221
  %v254 = vadd.f32 %v182, %v222
  %v255 = vadd.f32 %v185, %v223
  %v256 = vadd.f32 %v188, %v224
  %v257 = vadd.f32 %v191, %v225
  %v258 = vadd.f32 %v194, %v226
  %v259 = vxor.u32 %v227, 2147483648
  %v260 = vxor.u32 %v228, 2147483648
  %v261 = vxor.u32 %v229, 2147483648
  %v262 = vxor.u32 %v230, 2147483648
  %v263 = vxor.u32 %v231, 2147483648
  %v264 = vxor.u32 %v232, 2147483648
  %v265 = vxor.u32 %v233, 2147483648
  %v266 = vxor.u32 %v234, 2147483648
  %v267 = vxor.u32 %v235, 2147483648
  %v268 = vxor.u32 %v236, 2147483648
  %v269 = vxor.u32 %v237, 2147483648
  %v270 = vxor.u32 %v238, 2147483648
  %v271 = vxor.u32 %v239, 2147483648
  %v272 = vxor.u32 %v240, 2147483648
  %v273 = vxor.u32 %v241, 2147483648
  %v274 = vxor.u32 %v242, 2147483648
  %v275 = vxor.u32 %v243, 2147483648
  %v276 = vxor.u32 %v244, 2147483648
  %v277 = vxor.u32 %v245, 2147483648
  %v278 = vxor.u32 %v246, 2147483648
  %v279 = vxor.u32 %v247, 2147483648
  %v280 = vxor.u32 %v248, 2147483648
  %v281 = vxor.u32 %v249, 2147483648
  %v282 = vxor.u32 %v250, 2147483648
  %v283 = vxor.u32 %v251, 2147483648
  %v284 = vxor.u32 %v252, 2147483648
  %v285 = vxor.u32 %v253, 2147483648
  %v286 = vxor.u32 %v254, 2147483648
  %v287 = vxor.u32 %v255, 2147483648
  %v288 = vxor.u32 %v256, 2147483648
  %v289 = vxor.u32 %v257, 2147483648
  %v290 = vxor.u32 %v258, 2147483648
  %v291 = vmul.f32 %v259, 1.442695
  %v292 = vpow.pop %v291
  %v293 = vmul.f32 %v260, 1.442695
  %v294 = vpow.pop %v293
  %v295 = vmul.f32 %v261, 1.442695
  %v296 = vpow.pop %v295
  %v297 = vmul.f32 %v262, 1.442695
  %v298 = vpow.pop %v297
  %v299 = vmul.f32 %v263, 1.442695
  %v300 = vpow.pop %v299
  %v301 = vmul.f32 %v264, 1.442695
  %v302 = vpow.pop %v301
  %v303 = vmul.f32 %v265, 1.442695
  %v304 = vpow.pop %v303
  %v305 = vmul.f32 %v266, 1.442695
  %v306 = vpow.pop %v305
  %v307 = vmul.f32 %v267, 1.442695
  %v308 = vpow.pop %v307
  %v309 = vmul.f32 %v268, 1.442695
  %v310 = vpow.pop %v309
  %v311 = vmul.f32 %v269, 1.442695
  %v312 = vpow.pop %v311
  %v313 = vmul.f32 %v270, 1.442695
  %v314 = vpow.pop %v313
  %v315 = vmul.f32 %v271, 1.442695
  %v316 = vpow.pop %v315
  %v317 = vmul.f32 %v272, 1.442695
  %v318 = vpow.pop %v317
  %v319 = vmul.f32 %v273, 1.442695
  %v320 = vpow.pop %v319
  %v321 = vmul.f32 %v274, 1.442695
  %v322 = vpow.pop %v321
  %v323 = vmul.f32 %v275, 1.442695
  %v324 = vpow.pop %v323
  %v325 = vmul.f32 %v276, 1.442695
  %v326 = vpow.pop %v325
  %v327 = vmul.f32 %v277, 1.442695
  %v328 = vpow.pop %v327
  %v329 = vmul.f32 %v278, 1.442695
  %v330 = vpow.pop %v329
  %v331 = vmul.f32 %v279, 1.442695
  %v332 = vpow.pop %v331
  %v333 = vmul.f32 %v280, 1.442695
  %v334 = vpow.pop %v333
  %v335 = vmul.f32 %v281, 1.442695
  %v336 = vpow.pop %v335
  %v337 = vmul.f32 %v282, 1.442695
  %v338 = vpow.pop %v337
  %v339 = vmul.f32 %v283, 1.442695
  %v340 = vpow.pop %v339
  %v341 = vmul.f32 %v284, 1.442695
  %v342 = vpow.pop %v341
  %v343 = vmul.f32 %v285, 1.442695
  %v344 = vpow.pop %v343
  %v345 = vmul.f32 %v286, 1.442695
  %v346 = vpow.pop %v345
  %v347 = vmul.f32 %v287, 1.442695
  %v348 = vpow.pop %v347
  %v349 = vmul.f32 %v288, 1.442695
  %v350 = vpow.pop %v349
  %v351 = vmul.f32 %v289, 1.442695
  %v352 = vpow.pop %v351
  %v353 = vmul.f32 %v290, 1.442695
  %v354 = vpow.pop %v353
  %v355 = vadd.f32 %v292, 1.0
  %v356 = vadd.f32 %v294, 1.0
  %v357 = vadd.f32 %v296, 1.0
  %v358 = vadd.f32 %v298, 1.0
  %v359 = vadd.f32 %v300, 1.0
  %v360 = vadd.f32 %v302, 1.0
  %v361 = vadd.f32 %v304, 1.0
  %v362 = vadd.f32 %v306, 1.0
  %v363 = vadd.f32 %v308, 1.0
  %v364 = vadd.f32 %v310, 1.0
  %v365 = vadd.f32 %v312, 1.0
  %v366 = vadd.f32 %v314, 1.0
  %v367 = vadd.f32 %v316, 1.0
  %v368 = vadd.f32 %v318, 1.0
  %v369 = vadd.f32 %v320, 1.0
  %v370 = vadd.f32 %v322, 1.0
  %v371 = vadd.f32 %v324, 1.0
  %v372 = vadd.f32 %v326, 1.0
  %v373 = vadd.f32 %v328, 1.0
  %v374 = vadd.f32 %v330, 1.0
  %v375 = vadd.f32 %v332, 1.0
  %v376 = vadd.f32 %v334, 1.0
  %v377 = vadd.f32 %v336, 1.0
  %v378 = vadd.f32 %v338, 1.0
  %v379 = vadd.f32 %v340, 1.0
  %v380 = vadd.f32 %v342, 1.0
  %v381 = vadd.f32 %v344, 1.0
  %v382 = vadd.f32 %v346, 1.0
  %v383 = vadd.f32 %v348, 1.0
  %v384 = vadd.f32 %v350, 1.0
  %v385 = vadd.f32 %v352, 1.0
  %v386 = vadd.f32 %v354, 1.0
  %v387 = vrcp.pop %v355
  %v388 = vmul.f32 1.0, %v387
  %v389 = vrcp.pop %v356
  %v390 = vmul.f32 1.0, %v389
  %v391 = vrcp.pop %v357
  %v392 = vmul.f32 1.0, %v391
  %v393 = vrcp.pop %v358
  %v394 = vmul.f32 1.0, %v393
  %v395 = vrcp.pop %v359
  %v396 = vmul.f32 1.0, %v395
  %v397 = vrcp.pop %v360
  %v398 = vmul.f32 1.0, %v397
  %v399 = vrcp.pop %v361
  %v400 = vmul.f32 1.0, %v399
  %v401 = vrcp.pop %v362
  %v402 = vmul.f32 1.0, %v401
  %v403 = vrcp.pop %v363
  %v404 = vmul.f32 1.0, %v403
  %v405 = vrcp.pop %v364
  %v406 = vmul.f32 1.0, %v405
  %v407 = vrcp.pop %v365
  %v408 = vmul.f32 1.0, %v407
  %v409 = vrcp.pop %v366
  %v410 = vmul.f32 1.0, %v409
  %v411 = vrcp.pop %v367
  %v412 = vmul.f32 1.0, %v411
  %v413 = vrcp.pop %v368
  %v414 = vmul.f32 1.0, %v413
  %v415 = vrcp.pop %v369
  %v416 = vmul.f32 1.0, %v415
  %v417 = vrcp.pop %v370
  %v418 = vmul.f32 1.0, %v417
  %v419 = vrcp.pop %v371
  %v420 = vmul.f32 1.0, %v419
  %v421 = vrcp.pop %v372
  %v422 = vmul.f32 1.0, %v421
  %v423 = vrcp.pop %v373
  %v424 = vmul.f32 1.0, %v423
  %v425 = vrcp.pop %v374
  %v426 = vmul.f32 1.0, %v425
  %v427 = vrcp.pop %v375
  %v428 = vmul.f32 1.0, %v427
  %v429 = vrcp.pop %v376
  %v430 = vmul.f32 1.0, %v429
  %v431 = vrcp.pop %v377
  %v432 = vmul.f32 1.0, %v431
  %v433 = vrcp.pop %v378
  %v434 = vmul.f32 1.0, %v433
  %v435 = vrcp.pop %v379
  %v436 = vmul.f32 1.0, %v435
  %v437 = vrcp.pop %v380
  %v438 = vmul.f32 1.0, %v437
  %v439 = vrcp.pop %v381
  %v440 = vmul.f32 1.0, %v439
  %v441 = vrcp.pop %v382
  %v442 = vmul.f32 1.0, %v441
  %v443 = vrcp.pop %v383
  %v444 = vmul.f32 1.0, %v443
  %v445 = vrcp.pop %v384
  %v446 = vmul.f32 1.0, %v445
  %v447 = vrcp.pop %v385
  %v448 = vmul.f32 1.0, %v447
  %v449 = vrcp.pop %v386
  %v450 = vmul.f32 1.0, %v449
  %v451 = vld [vmem:[%s3] sm:$0xff]
  %v452 = vld [vmem:[%s3 + $0x8] sm:$0xff]
  %v453 = vld [vmem:[%s3 + $0x10] sm:$0xff]
  %v454 = vld [vmem:[%s3 + $0x18] sm:$0xff]
  %v455 = vld [vmem:[%s3 + $0x20] sm:$0xff]
  %v456 = vld [vmem:[%s3 + $0x28] sm:$0xff]
  %v457 = vld [vmem:[%s3 + $0x30] sm:$0xff]
  %v458 = vld [vmem:[%s3 + $0x38] sm:$0xff]
  %v459 = vld [vmem:[%s3 + $0x40] sm:$0xff]
  %v460 = vld [vmem:[%s3 + $0x48] sm:$0xff]
  %v461 = vld [vmem:[%s3 + $0x50] sm:$0xff]
  %v462 = vld [vmem:[%s3 + $0x58] sm:$0xff]
  %v463 = vld [vmem:[%s3 + $0x60] sm:$0xff]
  %v464 = vld [vmem:[%s3 + $0x68] sm:$0xff]
  %v465 = vld [vmem:[%s3 + $0x70] sm:$0xff]
  %v466 = vld [vmem:[%s3 + $0x78] sm:$0xff]
  %v467 = vld [vmem:[%s3 + $0x80] sm:$0xff]
  %v468 = vld [vmem:[%s3 + $0x88] sm:$0xff]
  %v469 = vld [vmem:[%s3 + $0x90] sm:$0xff]
  %v470 = vld [vmem:[%s3 + $0x98] sm:$0xff]
  %v471 = vld [vmem:[%s3 + $0xa0] sm:$0xff]
  %v472 = vld [vmem:[%s3 + $0xa8] sm:$0xff]
  %v473 = vld [vmem:[%s3 + $0xb0] sm:$0xff]
  %v474 = vld [vmem:[%s3 + $0xb8] sm:$0xff]
  %v475 = vld [vmem:[%s3 + $0xc0] sm:$0xff]
  %v476 = vld [vmem:[%s3 + $0xc8] sm:$0xff]
  %v477 = vld [vmem:[%s3 + $0xd0] sm:$0xff]
  %v478 = vld [vmem:[%s3 + $0xd8] sm:$0xff]
  %v479 = vld [vmem:[%s3 + $0xe0] sm:$0xff]
  %v480 = vld [vmem:[%s3 + $0xe8] sm:$0xff]
  %v481 = vld [vmem:[%s3 + $0xf0] sm:$0xff]
  %v482 = vld [vmem:[%s3 + $0xf8] sm:$0xff]
  %484 = vset.pattern.permute.xlu0 0
  %485 = vperm.xlu0 %484, %v388
  %v486 = vpop.permute.xlu0 %485
  %489 = vset.pattern.permute.xlu0 0
  %490 = vperm.xlu0 %489, %v390
  %v491 = vpop.permute.xlu0 %490
  %494 = vset.pattern.permute.xlu0 0
  %495 = vperm.xlu0 %494, %v392
  %v496 = vpop.permute.xlu0 %495
  %499 = vset.pattern.permute.xlu0 0
  %500 = vperm.xlu0 %499, %v394
  %v501 = vpop.permute.xlu0 %500
  %504 = vset.pattern.permute.xlu0 0
  %505 = vperm.xlu0 %504, %v396
  %v506 = vpop.permute.xlu0 %505
  %509 = vset.pattern.permute.xlu0 0
  %510 = vperm.xlu0 %509, %v398
  %v511 = vpop.permute.xlu0 %510
  %514 = vset.pattern.permute.xlu0 0
  %515 = vperm.xlu0 %514, %v400
  %v516 = vpop.permute.xlu0 %515
  %519 = vset.pattern.permute.xlu0 0
  %520 = vperm.xlu0 %519, %v402
  %v521 = vpop.permute.xlu0 %520
  %524 = vset.pattern.permute.xlu0 0
  %525 = vperm.xlu0 %524, %v404
  %v526 = vpop.permute.xlu0 %525
  %529 = vset.pattern.permute.xlu0 0
  %530 = vperm.xlu0 %529, %v406
  %v531 = vpop.permute.xlu0 %530
  %534 = vset.pattern.permute.xlu0 0
  %535 = vperm.xlu0 %534, %v408
  %v536 = vpop.permute.xlu0 %535
  %539 = vset.pattern.permute.xlu0 0
  %540 = vperm.xlu0 %539, %v410
  %v541 = vpop.permute.xlu0 %540
  %544 = vset.pattern.permute.xlu0 0
  %545 = vperm.xlu0 %544, %v412
  %v546 = vpop.permute.xlu0 %545
  %549 = vset.pattern.permute.xlu0 0
  %550 = vperm.xlu0 %549, %v414
  %v551 = vpop.permute.xlu0 %550
  %554 = vset.pattern.permute.xlu0 0
  %555 = vperm.xlu0 %554, %v416
  %v556 = vpop.permute.xlu0 %555
  %559 = vset.pattern.permute.xlu0 0
  %560 = vperm.xlu0 %559, %v418
  %v561 = vpop.permute.xlu0 %560
  %564 = vset.pattern.permute.xlu0 0
  %565 = vperm.xlu0 %564, %v420
  %v566 = vpop.permute.xlu0 %565
  %569 = vset.pattern.permute.xlu0 0
  %570 = vperm.xlu0 %569, %v422
  %v571 = vpop.permute.xlu0 %570
  %574 = vset.pattern.permute.xlu0 0
  %575 = vperm.xlu0 %574, %v424
  %v576 = vpop.permute.xlu0 %575
  %579 = vset.pattern.permute.xlu0 0
  %580 = vperm.xlu0 %579, %v426
  %v581 = vpop.permute.xlu0 %580
  %584 = vset.pattern.permute.xlu0 0
  %585 = vperm.xlu0 %584, %v428
  %v586 = vpop.permute.xlu0 %585
  %589 = vset.pattern.permute.xlu0 0
  %590 = vperm.xlu0 %589, %v430
  %v591 = vpop.permute.xlu0 %590
  %594 = vset.pattern.permute.xlu0 0
  %595 = vperm.xlu0 %594, %v432
  %v596 = vpop.permute.xlu0 %595
  %599 = vset.pattern.permute.xlu0 0
  %600 = vperm.xlu0 %599, %v434
  %v601 = vpop.permute.xlu0 %600
  %604 = vset.pattern.permute.xlu0 0
  %605 = vperm.xlu0 %604, %v436
  %v606 = vpop.permute.xlu0 %605
  %609 = vset.pattern.permute.xlu0 0
  %610 = vperm.xlu0 %609, %v438
  %v611 = vpop.permute.xlu0 %610
  %614 = vset.pattern.permute.xlu0 0
  %615 = vperm.xlu0 %614, %v440
  %v616 = vpop.permute.xlu0 %615
  %619 = vset.pattern.permute.xlu0 0
  %620 = vperm.xlu0 %619, %v442
  %v621 = vpop.permute.xlu0 %620
  %624 = vset.pattern.permute.xlu0 0
  %625 = vperm.xlu0 %624, %v444
  %v626 = vpop.permute.xlu0 %625
  %629 = vset.pattern.permute.xlu0 0
  %630 = vperm.xlu0 %629, %v446
  %v631 = vpop.permute.xlu0 %630
  %634 = vset.pattern.permute.xlu0 0
  %635 = vperm.xlu0 %634, %v448
  %v636 = vpop.permute.xlu0 %635
  %639 = vset.pattern.permute.xlu0 0
  %640 = vperm.xlu0 %639, %v450
  %v641 = vpop.permute.xlu0 %640
  %v643 = vmul.f32 %v451, %v486
  %v644 = vmul.f32 %v452, %v491
  %v645 = vmul.f32 %v453, %v496
  %v646 = vmul.f32 %v454, %v501
  %v647 = vmul.f32 %v455, %v506
  %v648 = vmul.f32 %v456, %v511
  %v649 = vmul.f32 %v457, %v516
  %v650 = vmul.f32 %v458, %v521
  %v651 = vmul.f32 %v459, %v526
  %v652 = vmul.f32 %v460, %v531
  %v653 = vmul.f32 %v461, %v536
  %v654 = vmul.f32 %v462, %v541
  %v655 = vmul.f32 %v463, %v546
  %v656 = vmul.f32 %v464, %v551
  %v657 = vmul.f32 %v465, %v556
  %v658 = vmul.f32 %v466, %v561
  %v659 = vmul.f32 %v467, %v566
  %v660 = vmul.f32 %v468, %v571
  %v661 = vmul.f32 %v469, %v576
  %v662 = vmul.f32 %v470, %v581
  %v663 = vmul.f32 %v471, %v586
  %v664 = vmul.f32 %v472, %v591
  %v665 = vmul.f32 %v473, %v596
  %v666 = vmul.f32 %v474, %v601
  %v667 = vmul.f32 %v475, %v606
  %v668 = vmul.f32 %v476, %v611
  %v669 = vmul.f32 %v477, %v616
  %v670 = vmul.f32 %v478, %v621
  %v671 = vmul.f32 %v479, %v626
  %v672 = vmul.f32 %v480, %v631
  %v673 = vmul.f32 %v481, %v636
  %v674 = vmul.f32 %v482, %v641
  %v675 = vpack.c.bf16 %v644, %v643
  %v676 = vpack.c.bf16 %v646, %v645
  %v677 = vpack.c.bf16 %v648, %v647
  %v678 = vpack.c.bf16 %v650, %v649
  %v679 = vpack.c.bf16 %v652, %v651
  %v680 = vpack.c.bf16 %v654, %v653
  %v681 = vpack.c.bf16 %v656, %v655
  %v682 = vpack.c.bf16 %v658, %v657
  %v683 = vpack.c.bf16 %v660, %v659
  %v684 = vpack.c.bf16 %v662, %v661
  %v685 = vpack.c.bf16 %v664, %v663
  %v686 = vpack.c.bf16 %v666, %v665
  %v687 = vpack.c.bf16 %v668, %v667
  %v688 = vpack.c.bf16 %v670, %v669
  %v689 = vpack.c.bf16 %v672, %v671
  %v690 = vpack.c.bf16 %v674, %v673
  %v691 = vld [vmem:[%s4] sm:$0xff]
  %v692 = vld [vmem:[%s4 + $0x8] sm:$0xff]
  %v693 = vld [vmem:[%s4 + $0x10] sm:$0xff]
  %v694 = vld [vmem:[%s4 + $0x18] sm:$0xff]
  %v695 = vld [vmem:[%s4 + $0x20] sm:$0xff]
  %v696 = vld [vmem:[%s4 + $0x28] sm:$0xff]
  %v697 = vld [vmem:[%s4 + $0x30] sm:$0xff]
  %v698 = vld [vmem:[%s4 + $0x38] sm:$0xff]
  %v699 = vld [vmem:[%s4 + $0x40] sm:$0xff]
  %v700 = vld [vmem:[%s4 + $0x48] sm:$0xff]
  %v701 = vld [vmem:[%s4 + $0x50] sm:$0xff]
  %v702 = vld [vmem:[%s4 + $0x58] sm:$0xff]
  %v703 = vld [vmem:[%s4 + $0x60] sm:$0xff]
  %v704 = vld [vmem:[%s4 + $0x68] sm:$0xff]
  %v705 = vld [vmem:[%s4 + $0x70] sm:$0xff]
  %v706 = vld [vmem:[%s4 + $0x78] sm:$0xff]
  %v707 = vld [vmem:[%s4 + $0x80] sm:$0xff]
  %v708 = vld [vmem:[%s4 + $0x88] sm:$0xff]
  %v709 = vld [vmem:[%s4 + $0x90] sm:$0xff]
  %v710 = vld [vmem:[%s4 + $0x98] sm:$0xff]
  %v711 = vld [vmem:[%s4 + $0xa0] sm:$0xff]
  %v712 = vld [vmem:[%s4 + $0xa8] sm:$0xff]
  %v713 = vld [vmem:[%s4 + $0xb0] sm:$0xff]
  %v714 = vld [vmem:[%s4 + $0xb8] sm:$0xff]
  %v715 = vld [vmem:[%s4 + $0xc0] sm:$0xff]
  %v716 = vld [vmem:[%s4 + $0xc8] sm:$0xff]
  %v717 = vld [vmem:[%s4 + $0xd0] sm:$0xff]
  %v718 = vld [vmem:[%s4 + $0xd8] sm:$0xff]
  %v719 = vld [vmem:[%s4 + $0xe0] sm:$0xff]
  %v720 = vld [vmem:[%s4 + $0xe8] sm:$0xff]
  %v721 = vld [vmem:[%s4 + $0xf0] sm:$0xff]
  %v722 = vld [vmem:[%s4 + $0xf8] sm:$0xff]
  %v755 = vunpack.c.l.b16 %v691
  %v756 = vunpack.c.h.b16 %v691
  %v757 = vunpack.c.l.b16 %v692
  %v758 = vunpack.c.h.b16 %v692
  %v759 = vunpack.c.l.b16 %v693
  %v760 = vunpack.c.h.b16 %v693
  %v761 = vunpack.c.l.b16 %v694
  %v762 = vunpack.c.h.b16 %v694
  %v763 = vunpack.c.l.b16 %v695
  %v764 = vunpack.c.h.b16 %v695
  %v765 = vunpack.c.l.b16 %v696
  %v766 = vunpack.c.h.b16 %v696
  %v767 = vunpack.c.l.b16 %v697
  %v768 = vunpack.c.h.b16 %v697
  %v769 = vunpack.c.l.b16 %v698
  %v770 = vunpack.c.h.b16 %v698
  %v771 = vunpack.c.l.b16 %v699
  %v772 = vunpack.c.h.b16 %v699
  %v773 = vunpack.c.l.b16 %v700
  %v774 = vunpack.c.h.b16 %v700
  %v775 = vunpack.c.l.b16 %v701
  %v776 = vunpack.c.h.b16 %v701
  %v777 = vunpack.c.l.b16 %v702
  %v778 = vunpack.c.h.b16 %v702
  %v779 = vunpack.c.l.b16 %v703
  %v780 = vunpack.c.h.b16 %v703
  %v781 = vunpack.c.l.b16 %v704
  %v782 = vunpack.c.h.b16 %v704
  %v783 = vunpack.c.l.b16 %v705
  %v784 = vunpack.c.h.b16 %v705
  %v785 = vunpack.c.l.b16 %v706
  %v786 = vunpack.c.h.b16 %v706
  %v787 = vunpack.c.l.b16 %v707
  %v788 = vunpack.c.h.b16 %v707
  %v789 = vunpack.c.l.b16 %v708
  %v790 = vunpack.c.h.b16 %v708
  %v791 = vunpack.c.l.b16 %v709
  %v792 = vunpack.c.h.b16 %v709
  %v793 = vunpack.c.l.b16 %v710
  %v794 = vunpack.c.h.b16 %v710
  %v795 = vunpack.c.l.b16 %v711
  %v796 = vunpack.c.h.b16 %v711
  %v797 = vunpack.c.l.b16 %v712
  %v798 = vunpack.c.h.b16 %v712
  %v799 = vunpack.c.l.b16 %v713
  %v800 = vunpack.c.h.b16 %v713
  %v801 = vunpack.c.l.b16 %v714
  %v802 = vunpack.c.h.b16 %v714
  %v803 = vunpack.c.l.b16 %v715
  %v804 = vunpack.c.h.b16 %v715
  %v805 = vunpack.c.l.b16 %v716
  %v806 = vunpack.c.h.b16 %v716
  %v807 = vunpack.c.l.b16 %v717
  %v808 = vunpack.c.h.b16 %v717
  %v809 = vunpack.c.l.b16 %v718
  %v810 = vunpack.c.h.b16 %v718
  %v811 = vunpack.c.l.b16 %v719
  %v812 = vunpack.c.h.b16 %v719
  %v813 = vunpack.c.l.b16 %v720
  %v814 = vunpack.c.h.b16 %v720
  %v815 = vunpack.c.l.b16 %v721
  %v816 = vunpack.c.h.b16 %v721
  %v817 = vunpack.c.l.b16 %v722
  %v818 = vunpack.c.h.b16 %v722
  %v819 = vpack.c.b16 %v757, %v755
  %v820 = vpack.c.b16 %v758, %v756
  %v821 = vpack.c.b16 %v761, %v759
  %v822 = vpack.c.b16 %v762, %v760
  %v823 = vpack.c.b16 %v765, %v763
  %v824 = vpack.c.b16 %v766, %v764
  %v825 = vpack.c.b16 %v769, %v767
  %v826 = vpack.c.b16 %v770, %v768
  %v827 = vpack.c.b16 %v773, %v771
  %v828 = vpack.c.b16 %v774, %v772
  %v829 = vpack.c.b16 %v777, %v775
  %v830 = vpack.c.b16 %v778, %v776
  %v831 = vpack.c.b16 %v781, %v779
  %v832 = vpack.c.b16 %v782, %v780
  %v833 = vpack.c.b16 %v785, %v783
  %v834 = vpack.c.b16 %v786, %v784
  %v835 = vpack.c.b16 %v789, %v787
  %v836 = vpack.c.b16 %v790, %v788
  %v837 = vpack.c.b16 %v793, %v791
  %v838 = vpack.c.b16 %v794, %v792
  %v839 = vpack.c.b16 %v797, %v795
  %v840 = vpack.c.b16 %v798, %v796
  %v841 = vpack.c.b16 %v801, %v799
  %v842 = vpack.c.b16 %v802, %v800
  %v843 = vpack.c.b16 %v805, %v803
  %v844 = vpack.c.b16 %v806, %v804
  %v845 = vpack.c.b16 %v809, %v807
  %v846 = vpack.c.b16 %v810, %v808
  %v847 = vpack.c.b16 %v813, %v811
  %v848 = vpack.c.b16 %v814, %v812
  %v849 = vpack.c.b16 %v817, %v815
  %v850 = vpack.c.b16 %v818, %v816
  %883 = vmatprep.subr.bf16.mxu0 0
  %884 = vmatpush1.bf16.msra.mxu0 %v682
  %885 = vmatprep.subr.bf16.mxu0 0
  %886 = vmatpush1.bf16.msra.mxu0 %v681
  %887 = vmatprep.subr.bf16.mxu0 0
  %888 = vmatpush1.bf16.msra.mxu0 %v680
  %889 = vmatprep.subr.bf16.mxu0 0
  %890 = vmatpush1.bf16.msra.mxu0 %v679
  %891 = vmatprep.subr.bf16.mxu0 0
  %892 = vmatpush1.bf16.msra.mxu0 %v678
  %893 = vmatprep.subr.bf16.mxu0 0
  %894 = vmatpush1.bf16.msra.mxu0 %v677
  %895 = vmatprep.subr.bf16.mxu0 0
  %896 = vmatpush1.bf16.msra.mxu0 %v676
  %897 = vmatprep.subr.bf16.mxu0 0
  %898 = vmatpush1.bf16.msra.mxu0 %v675
  %899 = vmatprep.subr.bf16.mxu0 0
  %900 = vmatpush2.bf16.msra.mxu0 %v690
  %901 = vmatprep.subr.bf16.mxu0 0
  %902 = vmatpush2.bf16.msra.mxu0 %v689
  %903 = vmatprep.subr.bf16.mxu0 0
  %904 = vmatpush2.bf16.msra.mxu0 %v688
  %905 = vmatprep.subr.bf16.mxu0 0
  %906 = vmatpush2.bf16.msra.mxu0 %v687
  %907 = vmatprep.subr.bf16.mxu0 0
  %908 = vmatpush2.bf16.msra.mxu0 %v686
  %909 = vmatprep.subr.bf16.mxu0 0
  %910 = vmatpush2.bf16.msra.mxu0 %v685
  %911 = vmatprep.subr.bf16.mxu0 0
  %912 = vmatpush2.bf16.msra.mxu0 %v684
  %913 = vmatprep.subr.bf16.mxu0 0
  %914 = vmatpush2.bf16.msra.mxu0 %v683
  %915 = vmatprep.mubr.bf16.mxu0 %v820
  %916 = vmatmul.mubr.bf16.gmra.mxu0 %v819
  %v917 = vpop.f32.mrf.mxu0
  %v918 = vadd.f32 0.0, %v917
  %v919 = vpop.f32.mrf.mxu0
  %v920 = vpop.f32.mrf.mxu0
  %v921 = vadd.f32 0.0, %v920
  %v922 = vpop.f32.mrf.mxu0
  %923 = vmatprep.mubr.bf16.mxu0 %v822
  %924 = vmatmul.mubr.bf16.gmra.mxu0 %v821
  %v925 = vpop.f32.mrf.mxu0
  %v926 = vadd.f32 0.0, %v925
  %v927 = vpop.f32.mrf.mxu0
  %v928 = vpop.f32.mrf.mxu0
  %v929 = vadd.f32 0.0, %v928
  %v930 = vpop.f32.mrf.mxu0
  %931 = vmatprep.mubr.bf16.mxu0 %v824
  %932 = vmatmul.mubr.bf16.gmra.mxu0 %v823
  %v933 = vpop.f32.mrf.mxu0
  %v934 = vadd.f32 0.0, %v933
  %v935 = vpop.f32.mrf.mxu0
  %v936 = vpop.f32.mrf.mxu0
  %v937 = vadd.f32 0.0, %v936
  %v938 = vpop.f32.mrf.mxu0
  %939 = vmatprep.mubr.bf16.mxu0 %v826
  %940 = vmatmul.mubr.bf16.gmra.mxu0 %v825
  %v941 = vpop.f32.mrf.mxu0
  %v942 = vadd.f32 0.0, %v941
  %v943 = vpop.f32.mrf.mxu0
  %v944 = vpop.f32.mrf.mxu0
  %v945 = vadd.f32 0.0, %v944
  %v946 = vpop.f32.mrf.mxu0
  %947 = vmatprep.mubr.bf16.mxu0 %v828
  %948 = vmatmul.mubr.bf16.gmra.mxu0 %v827
  %v949 = vpop.f32.mrf.mxu0
  %v950 = vadd.f32 0.0, %v949
  %v951 = vpop.f32.mrf.mxu0
  %v952 = vpop.f32.mrf.mxu0
  %v953 = vadd.f32 0.0, %v952
  %v954 = vpop.f32.mrf.mxu0
  %955 = vmatprep.mubr.bf16.mxu0 %v830
  %956 = vmatmul.mubr.bf16.gmra.mxu0 %v829
  %v957 = vpop.f32.mrf.mxu0
  %v958 = vadd.f32 0.0, %v957
  %v959 = vpop.f32.mrf.mxu0
  %v960 = vpop.f32.mrf.mxu0
  %v961 = vadd.f32 0.0, %v960
  %v962 = vpop.f32.mrf.mxu0
  %963 = vmatprep.mubr.bf16.mxu0 %v832
  %964 = vmatmul.mubr.bf16.gmra.mxu0 %v831
  %v965 = vpop.f32.mrf.mxu0
  %v966 = vadd.f32 0.0, %v965
  %v967 = vpop.f32.mrf.mxu0
  %v968 = vpop.f32.mrf.mxu0
  %v969 = vadd.f32 0.0, %v968
  %v970 = vpop.f32.mrf.mxu0
  %971 = vmatprep.mubr.bf16.mxu0 %v834
  %972 = vmatmul.mubr.bf16.gmra.mxu0 %v833
  %v973 = vpop.f32.mrf.mxu0
  %v974 = vadd.f32 0.0, %v973
  %v975 = vpop.f32.mrf.mxu0
  %v976 = vpop.f32.mrf.mxu0
  %v977 = vadd.f32 0.0, %v976
  %v978 = vpop.f32.mrf.mxu0
  %979 = vmatprep.mubr.bf16.mxu0 %v836
  %980 = vmatmul.mubr.bf16.gmra.mxu0 %v835
  %v981 = vpop.f32.mrf.mxu0
  %v982 = vadd.f32 0.0, %v981
  %v983 = vpop.f32.mrf.mxu0
  %v984 = vpop.f32.mrf.mxu0
  %v985 = vadd.f32 0.0, %v984
  %v986 = vpop.f32.mrf.mxu0
  %987 = vmatprep.mubr.bf16.mxu0 %v838
  %988 = vmatmul.mubr.bf16.gmra.mxu0 %v837
  %v989 = vpop.f32.mrf.mxu0
  %v990 = vadd.f32 0.0, %v989
  %v991 = vpop.f32.mrf.mxu0
  %v992 = vpop.f32.mrf.mxu0
  %v993 = vadd.f32 0.0, %v992
  %v994 = vpop.f32.mrf.mxu0
  %995 = vmatprep.mubr.bf16.mxu0 %v840
  %996 = vmatmul.mubr.bf16.gmra.mxu0 %v839
  %v997 = vpop.f32.mrf.mxu0
  %v998 = vadd.f32 0.0, %v997
  %v999 = vpop.f32.mrf.mxu0
  %v1000 = vpop.f32.mrf.mxu0
  %v1001 = vadd.f32 0.0, %v1000
  %v1002 = vpop.f32.mrf.mxu0
  %1003 = vmatprep.mubr.bf16.mxu0 %v842
  %1004 = vmatmul.mubr.bf16.gmra.mxu0 %v841
  %v1005 = vpop.f32.mrf.mxu0
  %v1006 = vadd.f32 0.0, %v1005
  %v1007 = vpop.f32.mrf.mxu0
  %v1008 = vpop.f32.mrf.mxu0
  %v1009 = vadd.f32 0.0, %v1008
  %v1010 = vpop.f32.mrf.mxu0
  %1011 = vmatprep.mubr.bf16.mxu0 %v844
  %1012 = vmatmul.mubr.bf16.gmra.mxu0 %v843
  %v1013 = vpop.f32.mrf.mxu0
  %v1014 = vadd.f32 0.0, %v1013
  %v1015 = vpop.f32.mrf.mxu0
  %v1016 = vpop.f32.mrf.mxu0
  %v1017 = vadd.f32 0.0, %v1016
  %v1018 = vpop.f32.mrf.mxu0
  %1019 = vmatprep.mubr.bf16.mxu0 %v846
  %1020 = vmatmul.mubr.bf16.gmra.mxu0 %v845
  %v1021 = vpop.f32.mrf.mxu0
  %v1022 = vadd.f32 0.0, %v1021
  %v1023 = vpop.f32.mrf.mxu0
  %v1024 = vpop.f32.mrf.mxu0
  %v1025 = vadd.f32 0.0, %v1024
  %v1026 = vpop.f32.mrf.mxu0
  %1027 = vmatprep.mubr.bf16.mxu0 %v848
  %1028 = vmatmul.mubr.bf16.gmra.mxu0 %v847
  %v1029 = vpop.f32.mrf.mxu0
  %v1030 = vadd.f32 0.0, %v1029
  %v1031 = vpop.f32.mrf.mxu0
  %v1032 = vpop.f32.mrf.mxu0
  %v1033 = vadd.f32 0.0, %v1032
  %v1034 = vpop.f32.mrf.mxu0
  %1035 = vmatprep.mubr.bf16.mxu0 %v850
  %1036 = vmatmul.mubr.bf16.gmra.mxu0 %v849
  %v1037 = vpop.f32.mrf.mxu0
  %v1038 = vadd.f32 0.0, %v1037
  %v1039 = vpop.f32.mrf.mxu0
  %v1040 = vpop.f32.mrf.mxu0
  %v1041 = vadd.f32 0.0, %v1040
  %v1042 = vpop.f32.mrf.mxu0
  %1043 = vdwg.mxu0
  %vm1044 = vcmask 400384
  %v1045 = vsel %vm1044, %v918, 0.0
  %1046 = vadd.xlane.f32.xlu0 %v1045
  %v1047 = vpop.xlane.xlu0 %1046
  %v1048 = vsel %vm1044, %v921, 0.0
  %1049 = vadd.xlane.f32.xlu0 %v1048
  %v1050 = vpop.xlane.xlu0 %1049
  %v1051 = vsel %vm1044, %v926, 0.0
  %1052 = vadd.xlane.f32.xlu0 %v1051
  %v1053 = vpop.xlane.xlu0 %1052
  %v1054 = vsel %vm1044, %v929, 0.0
  %1055 = vadd.xlane.f32.xlu0 %v1054
  %v1056 = vpop.xlane.xlu0 %1055
  %v1057 = vsel %vm1044, %v934, 0.0
  %1058 = vadd.xlane.f32.xlu0 %v1057
  %v1059 = vpop.xlane.xlu0 %1058
  %v1060 = vsel %vm1044, %v937, 0.0
  %1061 = vadd.xlane.f32.xlu0 %v1060
  %v1062 = vpop.xlane.xlu0 %1061
  %v1063 = vsel %vm1044, %v942, 0.0
  %1064 = vadd.xlane.f32.xlu0 %v1063
  %v1065 = vpop.xlane.xlu0 %1064
  %v1066 = vsel %vm1044, %v945, 0.0
  %1067 = vadd.xlane.f32.xlu0 %v1066
  %v1068 = vpop.xlane.xlu0 %1067
  %v1069 = vsel %vm1044, %v950, 0.0
  %1070 = vadd.xlane.f32.xlu0 %v1069
  %v1071 = vpop.xlane.xlu0 %1070
  %v1072 = vsel %vm1044, %v953, 0.0
  %1073 = vadd.xlane.f32.xlu0 %v1072
  %v1074 = vpop.xlane.xlu0 %1073
  %v1075 = vsel %vm1044, %v958, 0.0
  %1076 = vadd.xlane.f32.xlu0 %v1075
  %v1077 = vpop.xlane.xlu0 %1076
  %v1078 = vsel %vm1044, %v961, 0.0
  %1079 = vadd.xlane.f32.xlu0 %v1078
  %v1080 = vpop.xlane.xlu0 %1079
  %v1081 = vsel %vm1044, %v966, 0.0
  %1082 = vadd.xlane.f32.xlu0 %v1081
  %v1083 = vpop.xlane.xlu0 %1082
  %v1084 = vsel %vm1044, %v969, 0.0
  %1085 = vadd.xlane.f32.xlu0 %v1084
  %v1086 = vpop.xlane.xlu0 %1085
  %v1087 = vsel %vm1044, %v974, 0.0
  %1088 = vadd.xlane.f32.xlu0 %v1087
  %v1089 = vpop.xlane.xlu0 %1088
  %v1090 = vsel %vm1044, %v977, 0.0
  %1091 = vadd.xlane.f32.xlu0 %v1090
  %v1092 = vpop.xlane.xlu0 %1091
  %v1093 = vsel %vm1044, %v982, 0.0
  %1094 = vadd.xlane.f32.xlu0 %v1093
  %v1095 = vpop.xlane.xlu0 %1094
  %v1096 = vsel %vm1044, %v985, 0.0
  %1097 = vadd.xlane.f32.xlu0 %v1096
  %v1098 = vpop.xlane.xlu0 %1097
  %v1099 = vsel %vm1044, %v990, 0.0
  %1100 = vadd.xlane.f32.xlu0 %v1099
  %v1101 = vpop.xlane.xlu0 %1100
  %v1102 = vsel %vm1044, %v993, 0.0
  %1103 = vadd.xlane.f32.xlu0 %v1102
  %v1104 = vpop.xlane.xlu0 %1103
  %v1105 = vsel %vm1044, %v998, 0.0
  %1106 = vadd.xlane.f32.xlu0 %v1105
  %v1107 = vpop.xlane.xlu0 %1106
  %v1108 = vsel %vm1044, %v1001, 0.0
  %1109 = vadd.xlane.f32.xlu0 %v1108
  %v1110 = vpop.xlane.xlu0 %1109
  %v1111 = vsel %vm1044, %v1006, 0.0
  %1112 = vadd.xlane.f32.xlu0 %v1111
  %v1113 = vpop.xlane.xlu0 %1112
  %v1114 = vsel %vm1044, %v1009, 0.0
  %1115 = vadd.xlane.f32.xlu0 %v1114
  %v1116 = vpop.xlane.xlu0 %1115
  %v1117 = vsel %vm1044, %v1014, 0.0
  %1118 = vadd.xlane.f32.xlu0 %v1117
  %v1119 = vpop.xlane.xlu0 %1118
  %v1120 = vsel %vm1044, %v1017, 0.0
  %1121 = vadd.xlane.f32.xlu0 %v1120
  %v1122 = vpop.xlane.xlu0 %1121
  %v1123 = vsel %vm1044, %v1022, 0.0
  %1124 = vadd.xlane.f32.xlu0 %v1123
  %v1125 = vpop.xlane.xlu0 %1124
  %v1126 = vsel %vm1044, %v1025, 0.0
  %1127 = vadd.xlane.f32.xlu0 %v1126
  %v1128 = vpop.xlane.xlu0 %1127
  %v1129 = vsel %vm1044, %v1030, 0.0
  %1130 = vadd.xlane.f32.xlu0 %v1129
  %v1131 = vpop.xlane.xlu0 %1130
  %v1132 = vsel %vm1044, %v1033, 0.0
  %1133 = vadd.xlane.f32.xlu0 %v1132
  %v1134 = vpop.xlane.xlu0 %1133
  %v1135 = vsel %vm1044, %v1038, 0.0
  %1136 = vadd.xlane.f32.xlu0 %v1135
  %v1137 = vpop.xlane.xlu0 %1136
  %v1138 = vsel %vm1044, %v1041, 0.0
  %1139 = vadd.xlane.f32.xlu0 %v1138
  %v1140 = vpop.xlane.xlu0 %1139
  %v1141 = vmul.f32 %v1047, 0.020408163
  %v1142 = vmul.f32 %v1050, 0.020408163
  %v1143 = vmul.f32 %v1053, 0.020408163
  %v1144 = vmul.f32 %v1056, 0.020408163
  %v1145 = vmul.f32 %v1059, 0.020408163
  %v1146 = vmul.f32 %v1062, 0.020408163
  %v1147 = vmul.f32 %v1065, 0.020408163
  %v1148 = vmul.f32 %v1068, 0.020408163
  %v1149 = vmul.f32 %v1071, 0.020408163
  %v1150 = vmul.f32 %v1074, 0.020408163
  %v1151 = vmul.f32 %v1077, 0.020408163
  %v1152 = vmul.f32 %v1080, 0.020408163
  %v1153 = vmul.f32 %v1083, 0.020408163
  %v1154 = vmul.f32 %v1086, 0.020408163
  %v1155 = vmul.f32 %v1089, 0.020408163
  %v1156 = vmul.f32 %v1092, 0.020408163
  %v1157 = vmul.f32 %v1095, 0.020408163
  %v1158 = vmul.f32 %v1098, 0.020408163
  %v1159 = vmul.f32 %v1101, 0.020408163
  %v1160 = vmul.f32 %v1104, 0.020408163
  %v1161 = vmul.f32 %v1107, 0.020408163
  %v1162 = vmul.f32 %v1110, 0.020408163
  %v1163 = vmul.f32 %v1113, 0.020408163
  %v1164 = vmul.f32 %v1116, 0.020408163
  %v1165 = vmul.f32 %v1119, 0.020408163
  %v1166 = vmul.f32 %v1122, 0.020408163
  %v1167 = vmul.f32 %v1125, 0.020408163
  %v1168 = vmul.f32 %v1128, 0.020408163
  %v1169 = vmul.f32 %v1131, 0.020408163
  %v1170 = vmul.f32 %v1134, 0.020408163
  %v1171 = vmul.f32 %v1137, 0.020408163
  %v1172 = vmul.f32 %v1140, 0.020408163
  %v1173 = vmul.f32 %v918, %v918
  %v1174 = vmul.f32 %v921, %v921
  %v1175 = vmul.f32 %v926, %v926
  %v1176 = vmul.f32 %v929, %v929
  %v1177 = vmul.f32 %v934, %v934
  %v1178 = vmul.f32 %v937, %v937
  %v1179 = vmul.f32 %v942, %v942
  %v1180 = vmul.f32 %v945, %v945
  %v1181 = vmul.f32 %v950, %v950
  %v1182 = vmul.f32 %v953, %v953
  %v1183 = vmul.f32 %v958, %v958
  %v1184 = vmul.f32 %v961, %v961
  %v1185 = vmul.f32 %v966, %v966
  %v1186 = vmul.f32 %v969, %v969
  %v1187 = vmul.f32 %v974, %v974
  %v1188 = vmul.f32 %v977, %v977
  %v1189 = vmul.f32 %v982, %v982
  %v1190 = vmul.f32 %v985, %v985
  %v1191 = vmul.f32 %v990, %v990
  %v1192 = vmul.f32 %v993, %v993
  %v1193 = vmul.f32 %v998, %v998
  %v1194 = vmul.f32 %v1001, %v1001
  %v1195 = vmul.f32 %v1006, %v1006
  %v1196 = vmul.f32 %v1009, %v1009
  %v1197 = vmul.f32 %v1014, %v1014
  %v1198 = vmul.f32 %v1017, %v1017
  %v1199 = vmul.f32 %v1022, %v1022
  %v1200 = vmul.f32 %v1025, %v1025
  %v1201 = vmul.f32 %v1030, %v1030
  %v1202 = vmul.f32 %v1033, %v1033
  %v1203 = vmul.f32 %v1038, %v1038
  %v1204 = vmul.f32 %v1041, %v1041
  %v1205 = vsel %vm1044, %v1173, 0.0
  %1206 = vadd.xlane.f32.xlu0 %v1205
  %v1207 = vpop.xlane.xlu0 %1206
  %v1208 = vsel %vm1044, %v1174, 0.0
  %1209 = vadd.xlane.f32.xlu0 %v1208
  %v1210 = vpop.xlane.xlu0 %1209
  %v1211 = vsel %vm1044, %v1175, 0.0
  %1212 = vadd.xlane.f32.xlu0 %v1211
  %v1213 = vpop.xlane.xlu0 %1212
  %v1214 = vsel %vm1044, %v1176, 0.0
  %1215 = vadd.xlane.f32.xlu0 %v1214
  %v1216 = vpop.xlane.xlu0 %1215
  %v1217 = vsel %vm1044, %v1177, 0.0
  %1218 = vadd.xlane.f32.xlu0 %v1217
  %v1219 = vpop.xlane.xlu0 %1218
  %v1220 = vsel %vm1044, %v1178, 0.0
  %1221 = vadd.xlane.f32.xlu0 %v1220
  %v1222 = vpop.xlane.xlu0 %1221
  %v1223 = vsel %vm1044, %v1179, 0.0
  %1224 = vadd.xlane.f32.xlu0 %v1223
  %v1225 = vpop.xlane.xlu0 %1224
  %v1226 = vsel %vm1044, %v1180, 0.0
  %1227 = vadd.xlane.f32.xlu0 %v1226
  %v1228 = vpop.xlane.xlu0 %1227
  %v1229 = vsel %vm1044, %v1181, 0.0
  %1230 = vadd.xlane.f32.xlu0 %v1229
  %v1231 = vpop.xlane.xlu0 %1230
  %v1232 = vsel %vm1044, %v1182, 0.0
  %1233 = vadd.xlane.f32.xlu0 %v1232
  %v1234 = vpop.xlane.xlu0 %1233
  %v1235 = vsel %vm1044, %v1183, 0.0
  %1236 = vadd.xlane.f32.xlu0 %v1235
  %v1237 = vpop.xlane.xlu0 %1236
  %v1238 = vsel %vm1044, %v1184, 0.0
  %1239 = vadd.xlane.f32.xlu0 %v1238
  %v1240 = vpop.xlane.xlu0 %1239
  %v1241 = vsel %vm1044, %v1185, 0.0
  %1242 = vadd.xlane.f32.xlu0 %v1241
  %v1243 = vpop.xlane.xlu0 %1242
  %v1244 = vsel %vm1044, %v1186, 0.0
  %1245 = vadd.xlane.f32.xlu0 %v1244
  %v1246 = vpop.xlane.xlu0 %1245
  %v1247 = vsel %vm1044, %v1187, 0.0
  %1248 = vadd.xlane.f32.xlu0 %v1247
  %v1249 = vpop.xlane.xlu0 %1248
  %v1250 = vsel %vm1044, %v1188, 0.0
  %1251 = vadd.xlane.f32.xlu0 %v1250
  %v1252 = vpop.xlane.xlu0 %1251
  %v1253 = vsel %vm1044, %v1189, 0.0
  %1254 = vadd.xlane.f32.xlu0 %v1253
  %v1255 = vpop.xlane.xlu0 %1254
  %v1256 = vsel %vm1044, %v1190, 0.0
  %1257 = vadd.xlane.f32.xlu0 %v1256
  %v1258 = vpop.xlane.xlu0 %1257
  %v1259 = vsel %vm1044, %v1191, 0.0
  %1260 = vadd.xlane.f32.xlu0 %v1259
  %v1261 = vpop.xlane.xlu0 %1260
  %v1262 = vsel %vm1044, %v1192, 0.0
  %1263 = vadd.xlane.f32.xlu0 %v1262
  %v1264 = vpop.xlane.xlu0 %1263
  %v1265 = vsel %vm1044, %v1193, 0.0
  %1266 = vadd.xlane.f32.xlu0 %v1265
  %v1267 = vpop.xlane.xlu0 %1266
  %v1268 = vsel %vm1044, %v1194, 0.0
  %1269 = vadd.xlane.f32.xlu0 %v1268
  %v1270 = vpop.xlane.xlu0 %1269
  %v1271 = vsel %vm1044, %v1195, 0.0
  %1272 = vadd.xlane.f32.xlu0 %v1271
  %v1273 = vpop.xlane.xlu0 %1272
  %v1274 = vsel %vm1044, %v1196, 0.0
  %1275 = vadd.xlane.f32.xlu0 %v1274
  %v1276 = vpop.xlane.xlu0 %1275
  %v1277 = vsel %vm1044, %v1197, 0.0
  %1278 = vadd.xlane.f32.xlu0 %v1277
  %v1279 = vpop.xlane.xlu0 %1278
  %v1280 = vsel %vm1044, %v1198, 0.0
  %1281 = vadd.xlane.f32.xlu0 %v1280
  %v1282 = vpop.xlane.xlu0 %1281
  %v1283 = vsel %vm1044, %v1199, 0.0
  %1284 = vadd.xlane.f32.xlu0 %v1283
  %v1285 = vpop.xlane.xlu0 %1284
  %v1286 = vsel %vm1044, %v1200, 0.0
  %1287 = vadd.xlane.f32.xlu0 %v1286
  %v1288 = vpop.xlane.xlu0 %1287
  %v1289 = vsel %vm1044, %v1201, 0.0
  %1290 = vadd.xlane.f32.xlu0 %v1289
  %v1291 = vpop.xlane.xlu0 %1290
  %v1292 = vsel %vm1044, %v1202, 0.0
  %1293 = vadd.xlane.f32.xlu0 %v1292
  %v1294 = vpop.xlane.xlu0 %1293
  %v1295 = vsel %vm1044, %v1203, 0.0
  %1296 = vadd.xlane.f32.xlu0 %v1295
  %v1297 = vpop.xlane.xlu0 %1296
  %v1298 = vsel %vm1044, %v1204, 0.0
  %1299 = vadd.xlane.f32.xlu0 %v1298
  %v1300 = vpop.xlane.xlu0 %1299
  %v1301 = vmul.f32 %v1207, 0.020408163
  %v1302 = vmul.f32 %v1210, 0.020408163
  %v1303 = vmul.f32 %v1213, 0.020408163
  %v1304 = vmul.f32 %v1216, 0.020408163
  %v1305 = vmul.f32 %v1219, 0.020408163
  %v1306 = vmul.f32 %v1222, 0.020408163
  %v1307 = vmul.f32 %v1225, 0.020408163
  %v1308 = vmul.f32 %v1228, 0.020408163
  %v1309 = vmul.f32 %v1231, 0.020408163
  %v1310 = vmul.f32 %v1234, 0.020408163
  %v1311 = vmul.f32 %v1237, 0.020408163
  %v1312 = vmul.f32 %v1240, 0.020408163
  %v1313 = vmul.f32 %v1243, 0.020408163
  %v1314 = vmul.f32 %v1246, 0.020408163
  %v1315 = vmul.f32 %v1249, 0.020408163
  %v1316 = vmul.f32 %v1252, 0.020408163
  %v1317 = vmul.f32 %v1255, 0.020408163
  %v1318 = vmul.f32 %v1258, 0.020408163
  %v1319 = vmul.f32 %v1261, 0.020408163
  %v1320 = vmul.f32 %v1264, 0.020408163
  %v1321 = vmul.f32 %v1267, 0.020408163
  %v1322 = vmul.f32 %v1270, 0.020408163
  %v1323 = vmul.f32 %v1273, 0.020408163
  %v1324 = vmul.f32 %v1276, 0.020408163
  %v1325 = vmul.f32 %v1279, 0.020408163
  %v1326 = vmul.f32 %v1282, 0.020408163
  %v1327 = vmul.f32 %v1285, 0.020408163
  %v1328 = vmul.f32 %v1288, 0.020408163
  %v1329 = vmul.f32 %v1291, 0.020408163
  %v1330 = vmul.f32 %v1294, 0.020408163
  %v1331 = vmul.f32 %v1297, 0.020408163
  %v1332 = vmul.f32 %v1300, 0.020408163
  %v1333 = vmul.f32 %v1141, %v1141
  %v1334 = vmul.f32 %v1142, %v1142
  %v1335 = vmul.f32 %v1143, %v1143
  %v1336 = vmul.f32 %v1144, %v1144
  %v1337 = vmul.f32 %v1145, %v1145
  %v1338 = vmul.f32 %v1146, %v1146
  %v1339 = vmul.f32 %v1147, %v1147
  %v1340 = vmul.f32 %v1148, %v1148
  %v1341 = vmul.f32 %v1149, %v1149
  %v1342 = vmul.f32 %v1150, %v1150
  %v1343 = vmul.f32 %v1151, %v1151
  %v1344 = vmul.f32 %v1152, %v1152
  %v1345 = vmul.f32 %v1153, %v1153
  %v1346 = vmul.f32 %v1154, %v1154
  %v1347 = vmul.f32 %v1155, %v1155
  %v1348 = vmul.f32 %v1156, %v1156
  %v1349 = vmul.f32 %v1157, %v1157
  %v1350 = vmul.f32 %v1158, %v1158
  %v1351 = vmul.f32 %v1159, %v1159
  %v1352 = vmul.f32 %v1160, %v1160
  %v1353 = vmul.f32 %v1161, %v1161
  %v1354 = vmul.f32 %v1162, %v1162
  %v1355 = vmul.f32 %v1163, %v1163
  %v1356 = vmul.f32 %v1164, %v1164
  %v1357 = vmul.f32 %v1165, %v1165
  %v1358 = vmul.f32 %v1166, %v1166
  %v1359 = vmul.f32 %v1167, %v1167
  %v1360 = vmul.f32 %v1168, %v1168
  %v1361 = vmul.f32 %v1169, %v1169
  %v1362 = vmul.f32 %v1170, %v1170
  %v1363 = vmul.f32 %v1171, %v1171
  %v1364 = vmul.f32 %v1172, %v1172
  %v1365 = vsub.f32 %v1301, %v1333
  %v1366 = vsub.f32 %v1302, %v1334
  %v1367 = vsub.f32 %v1303, %v1335
  %v1368 = vsub.f32 %v1304, %v1336
  %v1369 = vsub.f32 %v1305, %v1337
  %v1370 = vsub.f32 %v1306, %v1338
  %v1371 = vsub.f32 %v1307, %v1339
  %v1372 = vsub.f32 %v1308, %v1340
  %v1373 = vsub.f32 %v1309, %v1341
  %v1374 = vsub.f32 %v1310, %v1342
  %v1375 = vsub.f32 %v1311, %v1343
  %v1376 = vsub.f32 %v1312, %v1344
  %v1377 = vsub.f32 %v1313, %v1345
  %v1378 = vsub.f32 %v1314, %v1346
  %v1379 = vsub.f32 %v1315, %v1347
  %v1380 = vsub.f32 %v1316, %v1348
  %v1381 = vsub.f32 %v1317, %v1349
  %v1382 = vsub.f32 %v1318, %v1350
  %v1383 = vsub.f32 %v1319, %v1351
  %v1384 = vsub.f32 %v1320, %v1352
  %v1385 = vsub.f32 %v1321, %v1353
  %v1386 = vsub.f32 %v1322, %v1354
  %v1387 = vsub.f32 %v1323, %v1355
  %v1388 = vsub.f32 %v1324, %v1356
  %v1389 = vsub.f32 %v1325, %v1357
  %v1390 = vsub.f32 %v1326, %v1358
  %v1391 = vsub.f32 %v1327, %v1359
  %v1392 = vsub.f32 %v1328, %v1360
  %v1393 = vsub.f32 %v1329, %v1361
  %v1394 = vsub.f32 %v1330, %v1362
  %v1395 = vsub.f32 %v1331, %v1363
  %v1396 = vsub.f32 %v1332, %v1364
  %v1397 = vmax.f32 %v1365, 0.0
  %v1398 = vmax.f32 %v1366, 0.0
  %v1399 = vmax.f32 %v1367, 0.0
  %v1400 = vmax.f32 %v1368, 0.0
  %v1401 = vmax.f32 %v1369, 0.0
  %v1402 = vmax.f32 %v1370, 0.0
  %v1403 = vmax.f32 %v1371, 0.0
  %v1404 = vmax.f32 %v1372, 0.0
  %v1405 = vmax.f32 %v1373, 0.0
  %v1406 = vmax.f32 %v1374, 0.0
  %v1407 = vmax.f32 %v1375, 0.0
  %v1408 = vmax.f32 %v1376, 0.0
  %v1409 = vmax.f32 %v1377, 0.0
  %v1410 = vmax.f32 %v1378, 0.0
  %v1411 = vmax.f32 %v1379, 0.0
  %v1412 = vmax.f32 %v1380, 0.0
  %v1413 = vmax.f32 %v1381, 0.0
  %v1414 = vmax.f32 %v1382, 0.0
  %v1415 = vmax.f32 %v1383, 0.0
  %v1416 = vmax.f32 %v1384, 0.0
  %v1417 = vmax.f32 %v1385, 0.0
  %v1418 = vmax.f32 %v1386, 0.0
  %v1419 = vmax.f32 %v1387, 0.0
  %v1420 = vmax.f32 %v1388, 0.0
  %v1421 = vmax.f32 %v1389, 0.0
  %v1422 = vmax.f32 %v1390, 0.0
  %v1423 = vmax.f32 %v1391, 0.0
  %v1424 = vmax.f32 %v1392, 0.0
  %v1425 = vmax.f32 %v1393, 0.0
  %v1426 = vmax.f32 %v1394, 0.0
  %v1427 = vmax.f32 %v1395, 0.0
  %v1428 = vmax.f32 %v1396, 0.0
  %v1429 = vadd.f32 %v1397, 1e-05
  %v1430 = vadd.f32 %v1398, 1e-05
  %v1431 = vadd.f32 %v1399, 1e-05
  %v1432 = vadd.f32 %v1400, 1e-05
  %v1433 = vadd.f32 %v1401, 1e-05
  %v1434 = vadd.f32 %v1402, 1e-05
  %v1435 = vadd.f32 %v1403, 1e-05
  %v1436 = vadd.f32 %v1404, 1e-05
  %v1437 = vadd.f32 %v1405, 1e-05
  %v1438 = vadd.f32 %v1406, 1e-05
  %v1439 = vadd.f32 %v1407, 1e-05
  %v1440 = vadd.f32 %v1408, 1e-05
  %v1441 = vadd.f32 %v1409, 1e-05
  %v1442 = vadd.f32 %v1410, 1e-05
  %v1443 = vadd.f32 %v1411, 1e-05
  %v1444 = vadd.f32 %v1412, 1e-05
  %v1445 = vadd.f32 %v1413, 1e-05
  %v1446 = vadd.f32 %v1414, 1e-05
  %v1447 = vadd.f32 %v1415, 1e-05
  %v1448 = vadd.f32 %v1416, 1e-05
  %v1449 = vadd.f32 %v1417, 1e-05
  %v1450 = vadd.f32 %v1418, 1e-05
  %v1451 = vadd.f32 %v1419, 1e-05
  %v1452 = vadd.f32 %v1420, 1e-05
  %v1453 = vadd.f32 %v1421, 1e-05
  %v1454 = vadd.f32 %v1422, 1e-05
  %v1455 = vadd.f32 %v1423, 1e-05
  %v1456 = vadd.f32 %v1424, 1e-05
  %v1457 = vadd.f32 %v1425, 1e-05
  %v1458 = vadd.f32 %v1426, 1e-05
  %v1459 = vadd.f32 %v1427, 1e-05
  %v1460 = vadd.f32 %v1428, 1e-05
  %v1461 = vrsqrt.pop %v1429
  %v1462 = vrsqrt.pop %v1430
  %v1463 = vrsqrt.pop %v1431
  %v1464 = vrsqrt.pop %v1432
  %v1465 = vrsqrt.pop %v1433
  %v1466 = vrsqrt.pop %v1434
  %v1467 = vrsqrt.pop %v1435
  %v1468 = vrsqrt.pop %v1436
  %v1469 = vrsqrt.pop %v1437
  %v1470 = vrsqrt.pop %v1438
  %v1471 = vrsqrt.pop %v1439
  %v1472 = vrsqrt.pop %v1440
  %v1473 = vrsqrt.pop %v1441
  %v1474 = vrsqrt.pop %v1442
  %v1475 = vrsqrt.pop %v1443
  %v1476 = vrsqrt.pop %v1444
  %v1477 = vrsqrt.pop %v1445
  %v1478 = vrsqrt.pop %v1446
  %v1479 = vrsqrt.pop %v1447
  %v1480 = vrsqrt.pop %v1448
  %v1481 = vrsqrt.pop %v1449
  %v1482 = vrsqrt.pop %v1450
  %v1483 = vrsqrt.pop %v1451
  %v1484 = vrsqrt.pop %v1452
  %v1485 = vrsqrt.pop %v1453
  %v1486 = vrsqrt.pop %v1454
  %v1487 = vrsqrt.pop %v1455
  %v1488 = vrsqrt.pop %v1456
  %v1489 = vrsqrt.pop %v1457
  %v1490 = vrsqrt.pop %v1458
  %v1491 = vrsqrt.pop %v1459
  %v1492 = vrsqrt.pop %v1460
  %v1493 = vld [vmem:[%s5] sm:$0xff]
  %v1494 = vld [vmem:[%s5 + $0x8] sm:$0xff]
  %v1495 = vld [vmem:[%s5 + $0x10] sm:$0xff]
  %v1496 = vld [vmem:[%s5 + $0x18] sm:$0xff]
  %v1497 = vld [vmem:[%s5 + $0x20] sm:$0xff]
  %v1498 = vld [vmem:[%s5 + $0x28] sm:$0xff]
  %v1499 = vld [vmem:[%s5 + $0x30] sm:$0xff]
  %v1500 = vld [vmem:[%s5 + $0x38] sm:$0xff]
  %v1501 = vld [vmem:[%s5 + $0x40] sm:$0xff]
  %v1502 = vld [vmem:[%s5 + $0x48] sm:$0xff]
  %v1503 = vld [vmem:[%s5 + $0x50] sm:$0xff]
  %v1504 = vld [vmem:[%s5 + $0x58] sm:$0xff]
  %v1505 = vld [vmem:[%s5 + $0x60] sm:$0xff]
  %v1506 = vld [vmem:[%s5 + $0x68] sm:$0xff]
  %v1507 = vld [vmem:[%s5 + $0x70] sm:$0xff]
  %v1508 = vld [vmem:[%s5 + $0x78] sm:$0xff]
  %v1509 = vld [vmem:[%s5 + $0x80] sm:$0xff]
  %v1510 = vld [vmem:[%s5 + $0x88] sm:$0xff]
  %v1511 = vld [vmem:[%s5 + $0x90] sm:$0xff]
  %v1512 = vld [vmem:[%s5 + $0x98] sm:$0xff]
  %v1513 = vld [vmem:[%s5 + $0xa0] sm:$0xff]
  %v1514 = vld [vmem:[%s5 + $0xa8] sm:$0xff]
  %v1515 = vld [vmem:[%s5 + $0xb0] sm:$0xff]
  %v1516 = vld [vmem:[%s5 + $0xb8] sm:$0xff]
  %v1517 = vld [vmem:[%s5 + $0xc0] sm:$0xff]
  %v1518 = vld [vmem:[%s5 + $0xc8] sm:$0xff]
  %v1519 = vld [vmem:[%s5 + $0xd0] sm:$0xff]
  %v1520 = vld [vmem:[%s5 + $0xd8] sm:$0xff]
  %v1521 = vld [vmem:[%s5 + $0xe0] sm:$0xff]
  %v1522 = vld [vmem:[%s5 + $0xe8] sm:$0xff]
  %v1523 = vld [vmem:[%s5 + $0xf0] sm:$0xff]
  %v1524 = vld [vmem:[%s5 + $0xf8] sm:$0xff]
  %v1525 = vmul.f32 %v1461, %v1493
  %v1526 = vmul.f32 %v1462, %v1494
  %v1527 = vmul.f32 %v1463, %v1495
  %v1528 = vmul.f32 %v1464, %v1496
  %v1529 = vmul.f32 %v1465, %v1497
  %v1530 = vmul.f32 %v1466, %v1498
  %v1531 = vmul.f32 %v1467, %v1499
  %v1532 = vmul.f32 %v1468, %v1500
  %v1533 = vmul.f32 %v1469, %v1501
  %v1534 = vmul.f32 %v1470, %v1502
  %v1535 = vmul.f32 %v1471, %v1503
  %v1536 = vmul.f32 %v1472, %v1504
  %v1537 = vmul.f32 %v1473, %v1505
  %v1538 = vmul.f32 %v1474, %v1506
  %v1539 = vmul.f32 %v1475, %v1507
  %v1540 = vmul.f32 %v1476, %v1508
  %v1541 = vmul.f32 %v1477, %v1509
  %v1542 = vmul.f32 %v1478, %v1510
  %v1543 = vmul.f32 %v1479, %v1511
  %v1544 = vmul.f32 %v1480, %v1512
  %v1545 = vmul.f32 %v1481, %v1513
  %v1546 = vmul.f32 %v1482, %v1514
  %v1547 = vmul.f32 %v1483, %v1515
  %v1548 = vmul.f32 %v1484, %v1516
  %v1549 = vmul.f32 %v1485, %v1517
  %v1550 = vmul.f32 %v1486, %v1518
  %v1551 = vmul.f32 %v1487, %v1519
  %v1552 = vmul.f32 %v1488, %v1520
  %v1553 = vmul.f32 %v1489, %v1521
  %v1554 = vmul.f32 %v1490, %v1522
  %v1555 = vmul.f32 %v1491, %v1523
  %v1556 = vmul.f32 %v1492, %v1524
  %v1557 = vld [vmem:[%s6] sm:$0xff]
  %v1558 = vld [vmem:[%s6 + $0x8] sm:$0xff]
  %v1559 = vld [vmem:[%s6 + $0x10] sm:$0xff]
  %v1560 = vld [vmem:[%s6 + $0x18] sm:$0xff]
  %v1561 = vld [vmem:[%s6 + $0x20] sm:$0xff]
  %v1562 = vld [vmem:[%s6 + $0x28] sm:$0xff]
  %v1563 = vld [vmem:[%s6 + $0x30] sm:$0xff]
  %v1564 = vld [vmem:[%s6 + $0x38] sm:$0xff]
  %v1565 = vld [vmem:[%s6 + $0x40] sm:$0xff]
  %v1566 = vld [vmem:[%s6 + $0x48] sm:$0xff]
  %v1567 = vld [vmem:[%s6 + $0x50] sm:$0xff]
  %v1568 = vld [vmem:[%s6 + $0x58] sm:$0xff]
  %v1569 = vld [vmem:[%s6 + $0x60] sm:$0xff]
  %v1570 = vld [vmem:[%s6 + $0x68] sm:$0xff]
  %v1571 = vld [vmem:[%s6 + $0x70] sm:$0xff]
  %v1572 = vld [vmem:[%s6 + $0x78] sm:$0xff]
  %v1573 = vld [vmem:[%s6 + $0x80] sm:$0xff]
  %v1574 = vld [vmem:[%s6 + $0x88] sm:$0xff]
  %v1575 = vld [vmem:[%s6 + $0x90] sm:$0xff]
  %v1576 = vld [vmem:[%s6 + $0x98] sm:$0xff]
  %v1577 = vld [vmem:[%s6 + $0xa0] sm:$0xff]
  %v1578 = vld [vmem:[%s6 + $0xa8] sm:$0xff]
  %v1579 = vld [vmem:[%s6 + $0xb0] sm:$0xff]
  %v1580 = vld [vmem:[%s6 + $0xb8] sm:$0xff]
  %v1581 = vld [vmem:[%s6 + $0xc0] sm:$0xff]
  %v1582 = vld [vmem:[%s6 + $0xc8] sm:$0xff]
  %v1583 = vld [vmem:[%s6 + $0xd0] sm:$0xff]
  %v1584 = vld [vmem:[%s6 + $0xd8] sm:$0xff]
  %v1585 = vld [vmem:[%s6 + $0xe0] sm:$0xff]
  %v1586 = vld [vmem:[%s6 + $0xe8] sm:$0xff]
  %v1587 = vld [vmem:[%s6 + $0xf0] sm:$0xff]
  %v1588 = vld [vmem:[%s6 + $0xf8] sm:$0xff]
  %v1589 = vmul.f32 %v1141, %v1525
  %v1590 = vmul.f32 %v1142, %v1526
  %v1591 = vmul.f32 %v1143, %v1527
  %v1592 = vmul.f32 %v1144, %v1528
  %v1593 = vmul.f32 %v1145, %v1529
  %v1594 = vmul.f32 %v1146, %v1530
  %v1595 = vmul.f32 %v1147, %v1531
  %v1596 = vmul.f32 %v1148, %v1532
  %v1597 = vmul.f32 %v1149, %v1533
  %v1598 = vmul.f32 %v1150, %v1534
  %v1599 = vmul.f32 %v1151, %v1535
  %v1600 = vmul.f32 %v1152, %v1536
  %v1601 = vmul.f32 %v1153, %v1537
  %v1602 = vmul.f32 %v1154, %v1538
  %v1603 = vmul.f32 %v1155, %v1539
  %v1604 = vmul.f32 %v1156, %v1540
  %v1605 = vmul.f32 %v1157, %v1541
  %v1606 = vmul.f32 %v1158, %v1542
  %v1607 = vmul.f32 %v1159, %v1543
  %v1608 = vmul.f32 %v1160, %v1544
  %v1609 = vmul.f32 %v1161, %v1545
  %v1610 = vmul.f32 %v1162, %v1546
  %v1611 = vmul.f32 %v1163, %v1547
  %v1612 = vmul.f32 %v1164, %v1548
  %v1613 = vmul.f32 %v1165, %v1549
  %v1614 = vmul.f32 %v1166, %v1550
  %v1615 = vmul.f32 %v1167, %v1551
  %v1616 = vmul.f32 %v1168, %v1552
  %v1617 = vmul.f32 %v1169, %v1553
  %v1618 = vmul.f32 %v1170, %v1554
  %v1619 = vmul.f32 %v1171, %v1555
  %v1620 = vmul.f32 %v1172, %v1556
  %v1621 = vsub.f32 %v1557, %v1589
  %v1622 = vsub.f32 %v1558, %v1590
  %v1623 = vsub.f32 %v1559, %v1591
  %v1624 = vsub.f32 %v1560, %v1592
  %v1625 = vsub.f32 %v1561, %v1593
  %v1626 = vsub.f32 %v1562, %v1594
  %v1627 = vsub.f32 %v1563, %v1595
  %v1628 = vsub.f32 %v1564, %v1596
  %v1629 = vsub.f32 %v1565, %v1597
  %v1630 = vsub.f32 %v1566, %v1598
  %v1631 = vsub.f32 %v1567, %v1599
  %v1632 = vsub.f32 %v1568, %v1600
  %v1633 = vsub.f32 %v1569, %v1601
  %v1634 = vsub.f32 %v1570, %v1602
  %v1635 = vsub.f32 %v1571, %v1603
  %v1636 = vsub.f32 %v1572, %v1604
  %v1637 = vsub.f32 %v1573, %v1605
  %v1638 = vsub.f32 %v1574, %v1606
  %v1639 = vsub.f32 %v1575, %v1607
  %v1640 = vsub.f32 %v1576, %v1608
  %v1641 = vsub.f32 %v1577, %v1609
  %v1642 = vsub.f32 %v1578, %v1610
  %v1643 = vsub.f32 %v1579, %v1611
  %v1644 = vsub.f32 %v1580, %v1612
  %v1645 = vsub.f32 %v1581, %v1613
  %v1646 = vsub.f32 %v1582, %v1614
  %v1647 = vsub.f32 %v1583, %v1615
  %v1648 = vsub.f32 %v1584, %v1616
  %v1649 = vsub.f32 %v1585, %v1617
  %v1650 = vsub.f32 %v1586, %v1618
  %v1651 = vsub.f32 %v1587, %v1619
  %v1652 = vsub.f32 %v1588, %v1620
  %1654 = vset.pattern.permute.xlu0 0
  %1655 = vperm.xlu0 %1654, %v1525
  %v1656 = vpop.permute.xlu0 %1655
  %1659 = vset.pattern.permute.xlu0 0
  %1660 = vperm.xlu0 %1659, %v1526
  %v1661 = vpop.permute.xlu0 %1660
  %1664 = vset.pattern.permute.xlu0 0
  %1665 = vperm.xlu0 %1664, %v1527
  %v1666 = vpop.permute.xlu0 %1665
  %1669 = vset.pattern.permute.xlu0 0
  %1670 = vperm.xlu0 %1669, %v1528
  %v1671 = vpop.permute.xlu0 %1670
  %1674 = vset.pattern.permute.xlu0 0
  %1675 = vperm.xlu0 %1674, %v1529
  %v1676 = vpop.permute.xlu0 %1675
  %1679 = vset.pattern.permute.xlu0 0
  %1680 = vperm.xlu0 %1679, %v1530
  %v1681 = vpop.permute.xlu0 %1680
  %1684 = vset.pattern.permute.xlu0 0
  %1685 = vperm.xlu0 %1684, %v1531
  %v1686 = vpop.permute.xlu0 %1685
  %1689 = vset.pattern.permute.xlu0 0
  %1690 = vperm.xlu0 %1689, %v1532
  %v1691 = vpop.permute.xlu0 %1690
  %1694 = vset.pattern.permute.xlu0 0
  %1695 = vperm.xlu0 %1694, %v1533
  %v1696 = vpop.permute.xlu0 %1695
  %1699 = vset.pattern.permute.xlu0 0
  %1700 = vperm.xlu0 %1699, %v1534
  %v1701 = vpop.permute.xlu0 %1700
  %1704 = vset.pattern.permute.xlu0 0
  %1705 = vperm.xlu0 %1704, %v1535
  %v1706 = vpop.permute.xlu0 %1705
  %1709 = vset.pattern.permute.xlu0 0
  %1710 = vperm.xlu0 %1709, %v1536
  %v1711 = vpop.permute.xlu0 %1710
  %1714 = vset.pattern.permute.xlu0 0
  %1715 = vperm.xlu0 %1714, %v1537
  %v1716 = vpop.permute.xlu0 %1715
  %1719 = vset.pattern.permute.xlu0 0
  %1720 = vperm.xlu0 %1719, %v1538
  %v1721 = vpop.permute.xlu0 %1720
  %1724 = vset.pattern.permute.xlu0 0
  %1725 = vperm.xlu0 %1724, %v1539
  %v1726 = vpop.permute.xlu0 %1725
  %1729 = vset.pattern.permute.xlu0 0
  %1730 = vperm.xlu0 %1729, %v1540
  %v1731 = vpop.permute.xlu0 %1730
  %1734 = vset.pattern.permute.xlu0 0
  %1735 = vperm.xlu0 %1734, %v1541
  %v1736 = vpop.permute.xlu0 %1735
  %1739 = vset.pattern.permute.xlu0 0
  %1740 = vperm.xlu0 %1739, %v1542
  %v1741 = vpop.permute.xlu0 %1740
  %1744 = vset.pattern.permute.xlu0 0
  %1745 = vperm.xlu0 %1744, %v1543
  %v1746 = vpop.permute.xlu0 %1745
  %1749 = vset.pattern.permute.xlu0 0
  %1750 = vperm.xlu0 %1749, %v1544
  %v1751 = vpop.permute.xlu0 %1750
  %1754 = vset.pattern.permute.xlu0 0
  %1755 = vperm.xlu0 %1754, %v1545
  %v1756 = vpop.permute.xlu0 %1755
  %1759 = vset.pattern.permute.xlu0 0
  %1760 = vperm.xlu0 %1759, %v1546
  %v1761 = vpop.permute.xlu0 %1760
  %1764 = vset.pattern.permute.xlu0 0
  %1765 = vperm.xlu0 %1764, %v1547
  %v1766 = vpop.permute.xlu0 %1765
  %1769 = vset.pattern.permute.xlu0 0
  %1770 = vperm.xlu0 %1769, %v1548
  %v1771 = vpop.permute.xlu0 %1770
  %1774 = vset.pattern.permute.xlu0 0
  %1775 = vperm.xlu0 %1774, %v1549
  %v1776 = vpop.permute.xlu0 %1775
  %1779 = vset.pattern.permute.xlu0 0
  %1780 = vperm.xlu0 %1779, %v1550
  %v1781 = vpop.permute.xlu0 %1780
  %1784 = vset.pattern.permute.xlu0 0
  %1785 = vperm.xlu0 %1784, %v1551
  %v1786 = vpop.permute.xlu0 %1785
  %1789 = vset.pattern.permute.xlu0 0
  %1790 = vperm.xlu0 %1789, %v1552
  %v1791 = vpop.permute.xlu0 %1790
  %1794 = vset.pattern.permute.xlu0 0
  %1795 = vperm.xlu0 %1794, %v1553
  %v1796 = vpop.permute.xlu0 %1795
  %1799 = vset.pattern.permute.xlu0 0
  %1800 = vperm.xlu0 %1799, %v1554
  %v1801 = vpop.permute.xlu0 %1800
  %1804 = vset.pattern.permute.xlu0 0
  %1805 = vperm.xlu0 %1804, %v1555
  %v1806 = vpop.permute.xlu0 %1805
  %1809 = vset.pattern.permute.xlu0 0
  %1810 = vperm.xlu0 %1809, %v1556
  %v1811 = vpop.permute.xlu0 %1810
  %v1813 = vmul.f32 %v918, %v1656
  %v1814 = vmul.f32 %v921, %v1661
  %v1815 = vmul.f32 %v926, %v1666
  %v1816 = vmul.f32 %v929, %v1671
  %v1817 = vmul.f32 %v934, %v1676
  %v1818 = vmul.f32 %v937, %v1681
  %v1819 = vmul.f32 %v942, %v1686
  %v1820 = vmul.f32 %v945, %v1691
  %v1821 = vmul.f32 %v950, %v1696
  %v1822 = vmul.f32 %v953, %v1701
  %v1823 = vmul.f32 %v958, %v1706
  %v1824 = vmul.f32 %v961, %v1711
  %v1825 = vmul.f32 %v966, %v1716
  %v1826 = vmul.f32 %v969, %v1721
  %v1827 = vmul.f32 %v974, %v1726
  %v1828 = vmul.f32 %v977, %v1731
  %v1829 = vmul.f32 %v982, %v1736
  %v1830 = vmul.f32 %v985, %v1741
  %v1831 = vmul.f32 %v990, %v1746
  %v1832 = vmul.f32 %v993, %v1751
  %v1833 = vmul.f32 %v998, %v1756
  %v1834 = vmul.f32 %v1001, %v1761
  %v1835 = vmul.f32 %v1006, %v1766
  %v1836 = vmul.f32 %v1009, %v1771
  %v1837 = vmul.f32 %v1014, %v1776
  %v1838 = vmul.f32 %v1017, %v1781
  %v1839 = vmul.f32 %v1022, %v1786
  %v1840 = vmul.f32 %v1025, %v1791
  %v1841 = vmul.f32 %v1030, %v1796
  %v1842 = vmul.f32 %v1033, %v1801
  %v1843 = vmul.f32 %v1038, %v1806
  %v1844 = vmul.f32 %v1041, %v1811
  %1846 = vset.pattern.permute.xlu0 0
  %1847 = vperm.xlu0 %1846, %v1621
  %v1848 = vpop.permute.xlu0 %1847
  %1851 = vset.pattern.permute.xlu0 0
  %1852 = vperm.xlu0 %1851, %v1622
  %v1853 = vpop.permute.xlu0 %1852
  %1856 = vset.pattern.permute.xlu0 0
  %1857 = vperm.xlu0 %1856, %v1623
  %v1858 = vpop.permute.xlu0 %1857
  %1861 = vset.pattern.permute.xlu0 0
  %1862 = vperm.xlu0 %1861, %v1624
  %v1863 = vpop.permute.xlu0 %1862
  %1866 = vset.pattern.permute.xlu0 0
  %1867 = vperm.xlu0 %1866, %v1625
  %v1868 = vpop.permute.xlu0 %1867
  %1871 = vset.pattern.permute.xlu0 0
  %1872 = vperm.xlu0 %1871, %v1626
  %v1873 = vpop.permute.xlu0 %1872
  %1876 = vset.pattern.permute.xlu0 0
  %1877 = vperm.xlu0 %1876, %v1627
  %v1878 = vpop.permute.xlu0 %1877
  %1881 = vset.pattern.permute.xlu0 0
  %1882 = vperm.xlu0 %1881, %v1628
  %v1883 = vpop.permute.xlu0 %1882
  %1886 = vset.pattern.permute.xlu0 0
  %1887 = vperm.xlu0 %1886, %v1629
  %v1888 = vpop.permute.xlu0 %1887
  %1891 = vset.pattern.permute.xlu0 0
  %1892 = vperm.xlu0 %1891, %v1630
  %v1893 = vpop.permute.xlu0 %1892
  %1896 = vset.pattern.permute.xlu0 0
  %1897 = vperm.xlu0 %1896, %v1631
  %v1898 = vpop.permute.xlu0 %1897
  %1901 = vset.pattern.permute.xlu0 0
  %1902 = vperm.xlu0 %1901, %v1632
  %v1903 = vpop.permute.xlu0 %1902
  %1906 = vset.pattern.permute.xlu0 0
  %1907 = vperm.xlu0 %1906, %v1633
  %v1908 = vpop.permute.xlu0 %1907
  %1911 = vset.pattern.permute.xlu0 0
  %1912 = vperm.xlu0 %1911, %v1634
  %v1913 = vpop.permute.xlu0 %1912
  %1916 = vset.pattern.permute.xlu0 0
  %1917 = vperm.xlu0 %1916, %v1635
  %v1918 = vpop.permute.xlu0 %1917
  %1921 = vset.pattern.permute.xlu0 0
  %1922 = vperm.xlu0 %1921, %v1636
  %v1923 = vpop.permute.xlu0 %1922
  %1926 = vset.pattern.permute.xlu0 0
  %1927 = vperm.xlu0 %1926, %v1637
  %v1928 = vpop.permute.xlu0 %1927
  %1931 = vset.pattern.permute.xlu0 0
  %1932 = vperm.xlu0 %1931, %v1638
  %v1933 = vpop.permute.xlu0 %1932
  %1936 = vset.pattern.permute.xlu0 0
  %1937 = vperm.xlu0 %1936, %v1639
  %v1938 = vpop.permute.xlu0 %1937
  %1941 = vset.pattern.permute.xlu0 0
  %1942 = vperm.xlu0 %1941, %v1640
  %v1943 = vpop.permute.xlu0 %1942
  %1946 = vset.pattern.permute.xlu0 0
  %1947 = vperm.xlu0 %1946, %v1641
  %v1948 = vpop.permute.xlu0 %1947
  %1951 = vset.pattern.permute.xlu0 0
  %1952 = vperm.xlu0 %1951, %v1642
  %v1953 = vpop.permute.xlu0 %1952
  %1956 = vset.pattern.permute.xlu0 0
  %1957 = vperm.xlu0 %1956, %v1643
  %v1958 = vpop.permute.xlu0 %1957
  %1961 = vset.pattern.permute.xlu0 0
  %1962 = vperm.xlu0 %1961, %v1644
  %v1963 = vpop.permute.xlu0 %1962
  %1966 = vset.pattern.permute.xlu0 0
  %1967 = vperm.xlu0 %1966, %v1645
  %v1968 = vpop.permute.xlu0 %1967
  %1971 = vset.pattern.permute.xlu0 0
  %1972 = vperm.xlu0 %1971, %v1646
  %v1973 = vpop.permute.xlu0 %1972
  %1976 = vset.pattern.permute.xlu0 0
  %1977 = vperm.xlu0 %1976, %v1647
  %v1978 = vpop.permute.xlu0 %1977
  %1981 = vset.pattern.permute.xlu0 0
  %1982 = vperm.xlu0 %1981, %v1648
  %v1983 = vpop.permute.xlu0 %1982
  %1986 = vset.pattern.permute.xlu0 0
  %1987 = vperm.xlu0 %1986, %v1649
  %v1988 = vpop.permute.xlu0 %1987
  %1991 = vset.pattern.permute.xlu0 0
  %1992 = vperm.xlu0 %1991, %v1650
  %v1993 = vpop.permute.xlu0 %1992
  %1996 = vset.pattern.permute.xlu0 0
  %1997 = vperm.xlu0 %1996, %v1651
  %v1998 = vpop.permute.xlu0 %1997
  %2001 = vset.pattern.permute.xlu0 0
  %2002 = vperm.xlu0 %2001, %v1652
  %v2003 = vpop.permute.xlu0 %2002
  %v2005 = vadd.f32 %v1813, %v1848
  %v2006 = vadd.f32 %v1814, %v1853
  %v2007 = vadd.f32 %v1815, %v1858
  %v2008 = vadd.f32 %v1816, %v1863
  %v2009 = vadd.f32 %v1817, %v1868
  %v2010 = vadd.f32 %v1818, %v1873
  %v2011 = vadd.f32 %v1819, %v1878
  %v2012 = vadd.f32 %v1820, %v1883
  %v2013 = vadd.f32 %v1821, %v1888
  %v2014 = vadd.f32 %v1822, %v1893
  %v2015 = vadd.f32 %v1823, %v1898
  %v2016 = vadd.f32 %v1824, %v1903
  %v2017 = vadd.f32 %v1825, %v1908
  %v2018 = vadd.f32 %v1826, %v1913
  %v2019 = vadd.f32 %v1827, %v1918
  %v2020 = vadd.f32 %v1828, %v1923
  %v2021 = vadd.f32 %v1829, %v1928
  %v2022 = vadd.f32 %v1830, %v1933
  %v2023 = vadd.f32 %v1831, %v1938
  %v2024 = vadd.f32 %v1832, %v1943
  %v2025 = vadd.f32 %v1833, %v1948
  %v2026 = vadd.f32 %v1834, %v1953
  %v2027 = vadd.f32 %v1835, %v1958
  %v2028 = vadd.f32 %v1836, %v1963
  %v2029 = vadd.f32 %v1837, %v1968
  %v2030 = vadd.f32 %v1838, %v1973
  %v2031 = vadd.f32 %v1839, %v1978
  %v2032 = vadd.f32 %v1840, %v1983
  %v2033 = vadd.f32 %v1841, %v1988
  %v2034 = vadd.f32 %v1842, %v1993
  %v2035 = vadd.f32 %v1843, %v1998
  %v2036 = vadd.f32 %v1844, %v2003
  %2037 = vst.msk [vmem:[%s7] sm:$0xff] %vm1044, %v2005
  %2038 = vst.msk [vmem:[%s7 + $0x8] sm:$0xff] %vm1044, %v2006
  %2039 = vst.msk [vmem:[%s7 + $0x10] sm:$0xff] %vm1044, %v2007
  %2040 = vst.msk [vmem:[%s7 + $0x18] sm:$0xff] %vm1044, %v2008
  %2041 = vst.msk [vmem:[%s7 + $0x20] sm:$0xff] %vm1044, %v2009
  %2042 = vst.msk [vmem:[%s7 + $0x28] sm:$0xff] %vm1044, %v2010
  %2043 = vst.msk [vmem:[%s7 + $0x30] sm:$0xff] %vm1044, %v2011
  %2044 = vst.msk [vmem:[%s7 + $0x38] sm:$0xff] %vm1044, %v2012
  %2045 = vst.msk [vmem:[%s7 + $0x40] sm:$0xff] %vm1044, %v2013
  %2046 = vst.msk [vmem:[%s7 + $0x48] sm:$0xff] %vm1044, %v2014
  %2047 = vst.msk [vmem:[%s7 + $0x50] sm:$0xff] %vm1044, %v2015
  %2048 = vst.msk [vmem:[%s7 + $0x58] sm:$0xff] %vm1044, %v2016
  %2049 = vst.msk [vmem:[%s7 + $0x60] sm:$0xff] %vm1044, %v2017
  %2050 = vst.msk [vmem:[%s7 + $0x68] sm:$0xff] %vm1044, %v2018
  %2051 = vst.msk [vmem:[%s7 + $0x70] sm:$0xff] %vm1044, %v2019
  %2052 = vst.msk [vmem:[%s7 + $0x78] sm:$0xff] %vm1044, %v2020
  %2053 = vst.msk [vmem:[%s7 + $0x80] sm:$0xff] %vm1044, %v2021
  %2054 = vst.msk [vmem:[%s7 + $0x88] sm:$0xff] %vm1044, %v2022
  %2055 = vst.msk [vmem:[%s7 + $0x90] sm:$0xff] %vm1044, %v2023
  %2056 = vst.msk [vmem:[%s7 + $0x98] sm:$0xff] %vm1044, %v2024
  %2057 = vst.msk [vmem:[%s7 + $0xa0] sm:$0xff] %vm1044, %v2025
  %2058 = vst.msk [vmem:[%s7 + $0xa8] sm:$0xff] %vm1044, %v2026
  %2059 = vst.msk [vmem:[%s7 + $0xb0] sm:$0xff] %vm1044, %v2027
  %2060 = vst.msk [vmem:[%s7 + $0xb8] sm:$0xff] %vm1044, %v2028
  %2061 = vst.msk [vmem:[%s7 + $0xc0] sm:$0xff] %vm1044, %v2029
  %2062 = vst.msk [vmem:[%s7 + $0xc8] sm:$0xff] %vm1044, %v2030
  %2063 = vst.msk [vmem:[%s7 + $0xd0] sm:$0xff] %vm1044, %v2031
  %2064 = vst.msk [vmem:[%s7 + $0xd8] sm:$0xff] %vm1044, %v2032
  %2065 = vst.msk [vmem:[%s7 + $0xe0] sm:$0xff] %vm1044, %v2033
  %2066 = vst.msk [vmem:[%s7 + $0xe8] sm:$0xff] %vm1044, %v2034
  %2067 = vst.msk [vmem:[%s7 + $0xf0] sm:$0xff] %vm1044, %v2035
  %2068 = vst.msk [vmem:[%s7 + $0xf8] sm:$0xff] %vm1044, %v2036
  // Predicated region
  $region30: #{tpu_custom_call.1} parent=0 // pred_check
    _
  $region31: #{tpu_custom_call.1} parent=0 // pred_check_branch
    %2070 = sbr.rel (0) target = $region33
  $region32: #{tpu_custom_call.1} parent=0 // pred_region
    _
  $region33: #{tpu_custom_call.1} parent=0 // pred_fallthru
    _
  // Predicated region
  $region34: #{tpu_custom_call.1} parent=0 // pred_check
    _
  $region35: #{tpu_custom_call.1} parent=0 // pred_check_branch
    %2072 = sbr.rel (0) target = $region37
  $region36: #{tpu_custom_call.1} parent=0 // pred_region
    _
  $region37: #{tpu_custom_call.1} parent=0 // pred_fallthru
    _

</llo_original>
